<compile_context>
chip_gen: v6e
topology: v6e:2x2x1
jax: 0.10.0
libtpu: 0.0.40
codegen_flags: <defaults>
</compile_context>

<pallas_src>
import functools
import math

import jax
import jax.numpy as jnp
from jax.experimental import pallas as pl
from jax.experimental.pallas import tpu as pltpu


# ----------------------------- config ---------------------------------------
class Config:
    hidden_size = 32
    num_attention_heads = 4
    intermediate_size = 64
    layer_norm_eps = 1e-5
    attention_dropout = 0.0  # dropout p=0 -> no-op, matching CLIP defaults


_GELU_C = math.sqrt(2.0 / math.pi)

# Row layout of the packed small-vector array (prepare_params / kernel).
_ROW_LN1_W, _ROW_LN1_B, _ROW_LN2_W, _ROW_LN2_B = 0, 1, 2, 3
_ROW_O_B, _ROW_FC2_B, _ROW_QKV_B, _ROW_FC1_B = 4, 5, 6, 7


# ----------------------------- kernel ---------------------------------------
def _encoder_layer_kernel(*refs, B, S, E, H, D, eps, has_mask):
    if has_mask:
        (x_ref, mask_ref, vecs_ref,
         qkvw_ref, ow_ref, f1w_ref, f2w_ref, out_ref) = refs
    else:
        (x_ref, vecs_ref,
         qkvw_ref, ow_ref, f1w_ref, f2w_ref, out_ref) = refs
        mask_ref = None

    cd = qkvw_ref.dtype                     # matmul operand dtype (f32 or bf16)
    I = f1w_ref.shape[1]

    x = x_ref[...].astype(jnp.float32)      # (B*S, E)
    vecs = vecs_ref[...]                    # (8, P) packed LN weights / biases, f32
    ln1w = vecs[_ROW_LN1_W:_ROW_LN1_W + 1, :E]
    ln1b = vecs[_ROW_LN1_B:_ROW_LN1_B + 1, :E]
    ln2w = vecs[_ROW_LN2_W:_ROW_LN2_W + 1, :E]
    ln2b = vecs[_ROW_LN2_B:_ROW_LN2_B + 1, :E]
    o_b  = vecs[_ROW_O_B:_ROW_O_B + 1, :E]
    f2b  = vecs[_ROW_FC2_B:_ROW_FC2_B + 1, :E]
    qkvb = vecs[_ROW_QKV_B:_ROW_QKV_B + 1, :3 * E]
    f1b  = vecs[_ROW_FC1_B:_ROW_FC1_B + 1, :I]

    def layer_norm(h, w, b):
        mu = jnp.mean(h, axis=-1, keepdims=True)
        var = jnp.mean(jnp.square(h - mu), axis=-1, keepdims=True)
        return (h - mu) * jax.lax.rsqrt(var + eps) * w + b

    # ---- LayerNorm 1 ----
    h = layer_norm(x, ln1w, ln1b)

    # ---- fused QKV projection: one (B*S, E) @ (E, 3E) MXU matmul.
    # The 1/sqrt(head_dim) scale is already folded into the Q weight/bias.
    qkv = jnp.dot(h.astype(cd), qkvw_ref[...],
                  preferred_element_type=jnp.float32) + qkvb      # (B*S, 3E)

    o_w = ow_ref[...]                                             # (E, E)

    # ---- multi-head attention, heads batched in the dot_general, batch (B=2)
    # as a tiny static loop.  Mask is a single combined additive tensor.
    attn_rows = []
    for b in range(B):
        blk = qkv[b * S:(b + 1) * S, :]                           # (S, 3E)
        q3 = jnp.stack([blk[:, h_ * D:(h_ + 1) * D] for h_ in range(H)])
        k3 = jnp.stack([blk[:, E + h_ * D:E + (h_ + 1) * D] for h_ in range(H)])
        v3 = jnp.stack([blk[:, 2 * E + h_ * D:2 * E + (h_ + 1) * D]
                        for h_ in range(H)])                      # each (H, S, D)

        s = jnp.einsum("hqd,hkd->hqk", q3.astype(cd), k3.astype(cd),
                       preferred_element_type=jnp.float32)        # (H, S, S)
        if has_mask:
            s = s + mask_ref[b].astype(jnp.float32)               # bcast over H
        s = s - jnp.max(s, axis=-1, keepdims=True)
        p = jnp.exp(s)
        p = p / jnp.sum(p, axis=-1, keepdims=True)                # exact softmax
        ctx = jnp.einsum("hqk,hkd->hqd", p.astype(cd), v3.astype(cd),
                         preferred_element_type=jnp.float32)      # (H, S, D)

        # Output projection folded per head (no lane-concat of head outputs):
        # concat_h(ctx_h) @ Wo == sum_h ctx_h @ Wo[h*D:(h+1)*D, :]
        ab = jnp.dot(ctx[0].astype(cd), o_w[0:D, :],
                     preferred_element_type=jnp.float32)
        for h_ in range(1, H):
            ab = ab + jnp.dot(ctx[h_].astype(cd),
                              o_w[h_ * D:(h_ + 1) * D, :],
                              preferred_element_type=jnp.float32)
        attn_rows.append(ab)

    attn = jnp.concatenate(attn_rows, axis=0) + o_b               # (B*S, E)

    # ---- residual 1 ----
    h1 = x + attn

    # ---- LayerNorm 2 + MLP (tanh-approximated GELU, as in the spec module) --
    h2 = layer_norm(h1, ln2w, ln2b)
    z = jnp.dot(h2.astype(cd), f1w_ref[...],
                preferred_element_type=jnp.float32) + f1b
    z = 0.5 * z * (1.0 + jnp.tanh(_GELU_C * (z + 0.044715 * z * z * z)))
    z = jnp.dot(z.astype(cd), f2w_ref[...],
                preferred_element_type=jnp.float32) + f2b

    # ---- residual 2 ----
    out_ref[...] = (h1 + z).astype(out_ref.dtype)


# ----------------------------- param prep (one-time) -------------------------
def prepare_params(params, config, compute_dtype=jnp.float32):
    """One-time parameter transform (NOT per call):
       - fold 1/sqrt(head_dim) into the Q projection,
       - fuse Q/K/V into a single (E, 3E) weight,
       - pack the 8 small LN-weight / bias vectors into one 128-lane-padded
         (8, P) f32 array -> a single DMA stream,
       - cast the big matrices to `compute_dtype` (bf16 at real dims)."""
    E = config.hidden_size
    D = E // config.num_attention_heads
    I = config.intermediate_size
    scale = D ** -0.5

    qkv_w = jnp.concatenate(
        [params["q_w"] * scale, params["k_w"], params["v_w"]], axis=1)
    qkv_b = jnp.concatenate(
        [params["q_b"] * scale, params["k_b"], params["v_b"]], axis=1)

    width = ((max(E, 3 * E, I) + 127) // 128) * 128

    def pad_row(v):
        v = jnp.asarray(v, jnp.float32).reshape(-1)
        return jnp.pad(v, (0, width - v.shape[0]))

    vecs = jnp.stack([
        pad_row(params["ln1_w"]), pad_row(params["ln1_b"]),
        pad_row(params["ln2_w"]), pad_row(params["ln2_b"]),
        pad_row(params["o_b"]),   pad_row(params["fc2_b"]),
        pad_row(qkv_b),           pad_row(params["fc1_b"]),
    ])                                                        # (8, width)

    return {
        "vecs": vecs,
        "qkv_w": qkv_w.astype(compute_dtype),
        "o_w": params["o_w"].astype(compute_dtype),
        "fc1_w": params["fc1_w"].astype(compute_dtype),
        "fc2_w": params["fc2_w"].astype(compute_dtype),
    }


# ----------------------------- wrapper ---------------------------------------
def clip_encoder_layer(x, attention_mask, causal_attention_mask, prepared, config):
    B, S, E = x.shape
    H = config.num_attention_heads
    D = E // H

    # Combine the two additive masks into ONE (B, S, S) tensor (one DMA, one
    # in-kernel add); skip the mask stream entirely when neither is given.
    has_mask = (attention_mask is not None) or (causal_attention_mask is not None)
    if has_mask:
        if attention_mask is None:
            m = causal_attention_mask
        elif causal_attention_mask is None:
            m = attention_mask
        else:
            m = attention_mask + causal_attention_mask
        mask = m.reshape(B, S, S).astype(jnp.float32)

    # Fold batch into the matmul M dimension (free row-major reshape) -> the
    # whole layer is one kernel invocation with M = B*S row slabs.
    x2d = x.reshape(B * S, E)

    kernel = functools.partial(
        _encoder_layer_kernel,
        B=B, S=S, E=E, H=H, D=D,
        eps=config.layer_norm_eps, has_mask=has_mask,
    )

    inputs = [x2d]
    if has_mask:
        inputs.append(mask)
    inputs += [prepared["vecs"], prepared["qkv_w"], prepared["o_w"],
               prepared["fc1_w"], prepared["fc2_w"]]

    out2d = pl.pallas_call(
        kernel,
        out_shape=jax.ShapeDtypeStruct((B * S, E), x.dtype),
        # Single invocation: every operand is a whole-array VMEM block, loaded
        # exactly once (no pipelining, hence no double-buffered weights).
        in_specs=[pl.BlockSpec(memory_space=pltpu.MemorySpace.VMEM)] * len(inputs),
        out_specs=pl.BlockSpec(memory_space=pltpu.MemorySpace.VMEM),
    )(*inputs)

    return out2d.reshape(B, S, E)


# ----------------------------- reference (plain JAX) -------------------------
def clip_encoder_layer_ref(x, amask, cmask, p, config):
    E = config.hidden_size
    H = config.num_attention_heads
    D = E // H
    eps = config.layer_norm_eps

    def ln(h, w, b):
        mu = jnp.mean(h, axis=-1, keepdims=True)
        var = jnp.mean((h - mu) ** 2, axis=-1, keepdims=True)
        return (h - mu) / jnp.sqrt(var + eps) * w + b

    B, S, _ = x.shape
    res = x
    h = ln(x, p["ln1_w"][0], p["ln1_b"][0])
    q = (h @ p["q_w"] + p["q_b"][0]) * (D ** -0.5)
    k = h @ p["k_w"] + p["k_b"][0]
    v = h @ p["v_w"] + p["v_b"][0]
    q = q.reshape(B, S, H, D).transpose(0, 2, 1, 3)
    k = k.reshape(B, S, H, D).transpose(0, 2, 1, 3)
    v = v.reshape(B, S, H, D).transpose(0, 2, 1, 3)
    s = jnp.einsum("bhqd,bhkd->bhqk", q, k) + cmask + amask
    w = jax.nn.softmax(s, axis=-1)
    o = jnp.einsum("bhqk,bhkd->bhqd", w, v).transpose(0, 2, 1, 3).reshape(B, S, E)
    o = o @ p["o_w"] + p["o_b"][0]
    h1 = res + o
    h2 = ln(h1, p["ln2_w"][0], p["ln2_b"][0])
    z = h2 @ p["fc1_w"] + p["fc1_b"][0]
    z = 0.5 * z * (1 + jnp.tanh(_GELU_C * (z + 0.044715 * z ** 3)))
    z = z @ p["fc2_w"] + p["fc2_b"][0]
    return h1 + z


# ----------------------------- main ------------------------------------------
if __name__ == "__main__":
    cfg = Config()
    B, S, E, I = 2, 8, cfg.hidden_size, cfg.intermediate_size

    key = jax.random.PRNGKey(0)
    keys = jax.random.split(key, 20)

    # Linear weights stored already transposed to (in_features, out_features):
    # y = x @ W + b, matching PyTorch's y = x @ weight.T + bias.
    def w(k, shape, scale=0.05):
        return jax.random.normal(k, shape, jnp.float32) * scale

    params = {
        "ln1_w": 1.0 + w(keys[13], (1, E), 0.1),
        "ln1_b": w(keys[14], (1, E), 0.1),
        "q_w": w(keys[0], (E, E)), "q_b": w(keys[1], (1, E)),
        "k_w": w(keys[2], (E, E)), "k_b": w(keys[3], (1, E)),
        "v_w": w(keys[4], (E, E)), "v_b": w(keys[5], (1, E)),
        "o_w": w(keys[6], (E, E)), "o_b": w(keys[7], (1, E)),
        "ln2_w": 1.0 + w(keys[15], (1, E), 0.1),
        "ln2_b": w(keys[16], (1, E), 0.1),
        "fc1_w": w(keys[8], (E, I)), "fc1_b": w(keys[9], (1, I)),
        "fc2_w": w(keys[10], (I, E)), "fc2_b": w(keys[11], (1, E)),
    }

    x = jax.random.normal(keys[12], (B, S, E), jnp.float32)
    attention_mask = jnp.zeros((B, 1, S, S), jnp.float32)
    causal = jnp.where(
        jnp.arange(S)[:, None] >= jnp.arange(S)[None, :], 0.0, -1e9
    ).astype(jnp.float32)
    causal_attention_mask = jnp.broadcast_to(causal, (B, 1, S, S))

    # One-time: fold scale, fuse QKV, pack small vectors.  (Pass
    # compute_dtype=jnp.bfloat16 at real CLIP dims; f32 keeps this check tight.)
    prepared = prepare_params(params, cfg, compute_dtype=jnp.float32)

    out = clip_encoder_layer(x, attention_mask, causal_attention_mask, prepared, cfg)
    out = jax.block_until_ready(out)

    ref = clip_encoder_layer_ref(x, attention_mask, causal_attention_mask, params, cfg)
    assert out.shape == (B, S, E)
    assert jnp.allclose(out, ref, atol=1e-3, rtol=1e-3), "mismatch vs reference"

    print("KERNEL_OK")
</pallas_src>

<mosaic_0001>
module attributes {stable_mosaic.version = 11 : i64} {
  func.func @_encoder_layer_kernel(%arg0: memref<16x32xf32, #tpu.memory_space<vmem>>, %arg1: memref<2x8x8xf32, #tpu.memory_space<vmem>>, %arg2: memref<8x128xf32, #tpu.memory_space<vmem>>, %arg3: memref<32x96xf32, #tpu.memory_space<vmem>>, %arg4: memref<32x32xf32, #tpu.memory_space<vmem>>, %arg5: memref<32x64xf32, #tpu.memory_space<vmem>>, %arg6: memref<64x32xf32, #tpu.memory_space<vmem>>, %arg7: memref<16x32xf32, #tpu.memory_space<vmem>>) attributes {dimension_semantics = [], scalar_prefetch = 0 : i64, scratch_operands = 0 : i64, tpu.core_type = #tpu.core_type<tc>} {
    %c0 = arith.constant 0 : index
    %c0_0 = arith.constant 0 : index
    %0 = vector.load %arg0[%c0, %c0_0] : memref<16x32xf32, #tpu.memory_space<vmem>>, vector<16x32xf32>
    %c0_1 = arith.constant 0 : index
    %c0_2 = arith.constant 0 : index
    %1 = vector.load %arg2[%c0_1, %c0_2] : memref<8x128xf32, #tpu.memory_space<vmem>>, vector<8x128xf32>
    %2 = vector.extract_strided_slice %1 {offsets = [0, 0], sizes = [1, 32], strides = [1, 1]} : vector<8x128xf32> to vector<1x32xf32>
    %3 = vector.extract_strided_slice %1 {offsets = [1, 0], sizes = [1, 32], strides = [1, 1]} : vector<8x128xf32> to vector<1x32xf32>
    %4 = vector.extract_strided_slice %1 {offsets = [2, 0], sizes = [1, 32], strides = [1, 1]} : vector<8x128xf32> to vector<1x32xf32>
    %5 = vector.extract_strided_slice %1 {offsets = [3, 0], sizes = [1, 32], strides = [1, 1]} : vector<8x128xf32> to vector<1x32xf32>
    %6 = vector.extract_strided_slice %1 {offsets = [4, 0], sizes = [1, 32], strides = [1, 1]} : vector<8x128xf32> to vector<1x32xf32>
    %7 = vector.extract_strided_slice %1 {offsets = [5, 0], sizes = [1, 32], strides = [1, 1]} : vector<8x128xf32> to vector<1x32xf32>
    %8 = vector.extract_strided_slice %1 {offsets = [6, 0], sizes = [1, 96], strides = [1, 1]} : vector<8x128xf32> to vector<1x96xf32>
    %9 = vector.extract_strided_slice %1 {offsets = [7, 0], sizes = [1, 64], strides = [1, 1]} : vector<8x128xf32> to vector<1x64xf32>
    %cst = arith.constant dense<0.000000e+00> : vector<16xf32>
    %10 = vector.multi_reduction <add>, %0, %cst [1] : vector<16x32xf32> to vector<16xf32>
    %11 = vector.shape_cast %10 : vector<16xf32> to vector<16x1xf32>
    %cst_3 = arith.constant 3.200000e+01 : f32
    %12 = vector.broadcast %cst_3 : f32 to vector<16x1xf32>
    %13 = arith.divf %11, %12 : vector<16x1xf32>
    %14 = vector.broadcast %13 : vector<16x1xf32> to vector<16x32xf32>
    %15 = arith.subf %0, %14 : vector<16x32xf32>
    %16 = arith.mulf %15, %15 : vector<16x32xf32>
    %cst_4 = arith.constant dense<0.000000e+00> : vector<16xf32>
    %17 = vector.multi_reduction <add>, %16, %cst_4 [1] : vector<16x32xf32> to vector<16xf32>
    %18 = vector.shape_cast %17 : vector<16xf32> to vector<16x1xf32>
    %cst_5 = arith.constant 3.200000e+01 : f32
    %19 = vector.broadcast %cst_5 : f32 to vector<16x1xf32>
    %20 = arith.divf %18, %19 : vector<16x1xf32>
    %21 = vector.broadcast %13 : vector<16x1xf32> to vector<16x32xf32>
    %22 = arith.subf %0, %21 : vector<16x32xf32>
    %cst_6 = arith.constant 9.99999974E-6 : f32
    %23 = vector.broadcast %cst_6 : f32 to vector<16x1xf32>
    %24 = arith.addf %20, %23 : vector<16x1xf32>
    %25 = math.rsqrt %24 : vector<16x1xf32>
    %26 = vector.broadcast %25 : vector<16x1xf32> to vector<16x32xf32>
    %27 = arith.mulf %22, %26 : vector<16x32xf32>
    %28 = vector.broadcast %2 : vector<1x32xf32> to vector<16x32xf32>
    %29 = arith.mulf %27, %28 : vector<16x32xf32>
    %30 = vector.broadcast %3 : vector<1x32xf32> to vector<16x32xf32>
    %31 = arith.addf %29, %30 : vector<16x32xf32>
    %c0_7 = arith.constant 0 : index
    %c0_8 = arith.constant 0 : index
    %32 = vector.load %arg3[%c0_7, %c0_8] : memref<32x96xf32, #tpu.memory_space<vmem>>, vector<32x96xf32>
    %cst_9 = arith.constant dense<0.000000e+00> : vector<16x96xf32>
    %33 = tpu.matmul %31, %32, %cst_9 {dimension_numbers = #tpu.dot_dimension_numbers<[1], [0], [0], [1], [0, 0, 1, 1], [], []>} : vector<16x32xf32>, vector<32x96xf32>, vector<16x96xf32> -> vector<16x96xf32>
    %34 = vector.broadcast %8 : vector<1x96xf32> to vector<16x96xf32>
    %35 = arith.addf %33, %34 : vector<16x96xf32>
    %c0_10 = arith.constant 0 : index
    %c0_11 = arith.constant 0 : index
    %36 = vector.load %arg4[%c0_10, %c0_11] : memref<32x32xf32, #tpu.memory_space<vmem>>, vector<32x32xf32>
    %37 = vector.extract_strided_slice %35 {offsets = [0, 0], sizes = [8, 96], strides = [1, 1]} : vector<16x96xf32> to vector<8x96xf32>
    %38 = vector.extract_strided_slice %37 {offsets = [0, 0], sizes = [8, 8], strides = [1, 1]} : vector<8x96xf32> to vector<8x8xf32>
    %39 = vector.extract_strided_slice %37 {offsets = [0, 8], sizes = [8, 8], strides = [1, 1]} : vector<8x96xf32> to vector<8x8xf32>
    %40 = vector.extract_strided_slice %37 {offsets = [0, 16], sizes = [8, 8], strides = [1, 1]} : vector<8x96xf32> to vector<8x8xf32>
    %41 = vector.extract_strided_slice %37 {offsets = [0, 24], sizes = [8, 8], strides = [1, 1]} : vector<8x96xf32> to vector<8x8xf32>
    %42 = vector.shape_cast %38 : vector<8x8xf32> to vector<1x8x8xf32>
    %43 = vector.shape_cast %39 : vector<8x8xf32> to vector<1x8x8xf32>
    %44 = vector.shape_cast %40 : vector<8x8xf32> to vector<1x8x8xf32>
    %45 = vector.shape_cast %41 : vector<8x8xf32> to vector<1x8x8xf32>
    %46 = tpu.concatenate %42, %43, %44, %45 in 0 : vector<1x8x8xf32>, vector<1x8x8xf32>, vector<1x8x8xf32>, vector<1x8x8xf32> -> vector<4x8x8xf32>
    %47 = vector.extract_strided_slice %37 {offsets = [0, 32], sizes = [8, 8], strides = [1, 1]} : vector<8x96xf32> to vector<8x8xf32>
    %48 = vector.extract_strided_slice %37 {offsets = [0, 40], sizes = [8, 8], strides = [1, 1]} : vector<8x96xf32> to vector<8x8xf32>
    %49 = vector.extract_strided_slice %37 {offsets = [0, 48], sizes = [8, 8], strides = [1, 1]} : vector<8x96xf32> to vector<8x8xf32>
    %50 = vector.extract_strided_slice %37 {offsets = [0, 56], sizes = [8, 8], strides = [1, 1]} : vector<8x96xf32> to vector<8x8xf32>
    %51 = vector.shape_cast %47 : vector<8x8xf32> to vector<1x8x8xf32>
    %52 = vector.shape_cast %48 : vector<8x8xf32> to vector<1x8x8xf32>
    %53 = vector.shape_cast %49 : vector<8x8xf32> to vector<1x8x8xf32>
    %54 = vector.shape_cast %50 : vector<8x8xf32> to vector<1x8x8xf32>
    %55 = tpu.concatenate %51, %52, %53, %54 in 0 : vector<1x8x8xf32>, vector<1x8x8xf32>, vector<1x8x8xf32>, vector<1x8x8xf32> -> vector<4x8x8xf32>
    %56 = vector.extract_strided_slice %37 {offsets = [0, 64], sizes = [8, 8], strides = [1, 1]} : vector<8x96xf32> to vector<8x8xf32>
    %57 = vector.extract_strided_slice %37 {offsets = [0, 72], sizes = [8, 8], strides = [1, 1]} : vector<8x96xf32> to vector<8x8xf32>
    %58 = vector.extract_strided_slice %37 {offsets = [0, 80], sizes = [8, 8], strides = [1, 1]} : vector<8x96xf32> to vector<8x8xf32>
    %59 = vector.extract_strided_slice %37 {offsets = [0, 88], sizes = [8, 8], strides = [1, 1]} : vector<8x96xf32> to vector<8x8xf32>
    %60 = vector.shape_cast %56 : vector<8x8xf32> to vector<1x8x8xf32>
    %61 = vector.shape_cast %57 : vector<8x8xf32> to vector<1x8x8xf32>
    %62 = vector.shape_cast %58 : vector<8x8xf32> to vector<1x8x8xf32>
    %63 = vector.shape_cast %59 : vector<8x8xf32> to vector<1x8x8xf32>
    %64 = tpu.concatenate %60, %61, %62, %63 in 0 : vector<1x8x8xf32>, vector<1x8x8xf32>, vector<1x8x8xf32>, vector<1x8x8xf32> -> vector<4x8x8xf32>
    "tpu.trace_start"() <{level = 10 : i32, message = "hqd,hkd->hqk"}> : () -> ()
    %cst_12 = arith.constant dense<0.000000e+00> : vector<4x8x8xf32>
    %65 = tpu.matmul %46, %55, %cst_12 {dimension_numbers = #tpu.dot_dimension_numbers<[2], [2], [1], [1], [0, 0, 0, 1, 1, 1], [0], [0]>} : vector<4x8x8xf32>, vector<4x8x8xf32>, vector<4x8x8xf32> -> vector<4x8x8xf32>
    "tpu.trace_stop"() : () -> ()
    %c0_13 = arith.constant 0 : index
    %c0_14 = arith.constant 0 : index
    %c0_15 = arith.constant 0 : index
    %66 = vector.load %arg1[%c0_13, %c0_14, %c0_15] : memref<2x8x8xf32, #tpu.memory_space<vmem>>, vector<1x8x8xf32>
    %67 = vector.shape_cast %66 : vector<1x8x8xf32> to vector<8x8xf32>
    %68 = vector.shape_cast %67 : vector<8x8xf32> to vector<1x8x8xf32>
    %69 = vector.broadcast %68 : vector<1x8x8xf32> to vector<4x8x8xf32>
    %70 = arith.addf %65, %69 : vector<4x8x8xf32>
    %cst_16 = arith.constant dense<0xFF800000> : vector<4x8xf32>
    %71 = vector.multi_reduction <maximumf>, %70, %cst_16 [2] : vector<4x8x8xf32> to vector<4x8xf32>
    %72 = vector.shape_cast %71 : vector<4x8xf32> to vector<4x8x1xf32>
    %73 = vector.broadcast %72 : vector<4x8x1xf32> to vector<4x8x8xf32>
    %74 = arith.subf %70, %73 : vector<4x8x8xf32>
    %75 = math.exp %74 : vector<4x8x8xf32>
    %cst_17 = arith.constant dense<0.000000e+00> : vector<4x8xf32>
    %76 = vector.multi_reduction <add>, %75, %cst_17 [2] : vector<4x8x8xf32> to vector<4x8xf32>
    %77 = vector.shape_cast %76 : vector<4x8xf32> to vector<4x8x1xf32>
    %78 = vector.broadcast %77 : vector<4x8x1xf32> to vector<4x8x8xf32>
    %79 = arith.divf %75, %78 : vector<4x8x8xf32>
    "tpu.trace_start"() <{level = 10 : i32, message = "hqk,hkd->hqd"}> : () -> ()
    %cst_18 = arith.constant dense<0.000000e+00> : vector<4x8x8xf32>
    %80 = tpu.matmul %79, %64, %cst_18 {dimension_numbers = #tpu.dot_dimension_numbers<[2], [1], [1], [2], [0, 0, 0, 1, 1, 2], [0], [0]>} : vector<4x8x8xf32>, vector<4x8x8xf32>, vector<4x8x8xf32> -> vector<4x8x8xf32>
    "tpu.trace_stop"() : () -> ()
    %81 = vector.extract_strided_slice %80 {offsets = [0, 0, 0], sizes = [1, 8, 8], strides = [1, 1, 1]} : vector<4x8x8xf32> to vector<1x8x8xf32>
    %82 = vector.shape_cast %81 : vector<1x8x8xf32> to vector<8x8xf32>
    %83 = vector.extract_strided_slice %36 {offsets = [0, 0], sizes = [8, 32], strides = [1, 1]} : vector<32x32xf32> to vector<8x32xf32>
    %cst_19 = arith.constant dense<0.000000e+00> : vector<8x32xf32>
    %84 = tpu.matmul %82, %83, %cst_19 {dimension_numbers = #tpu.dot_dimension_numbers<[1], [0], [0], [1], [0, 0, 1, 1], [], []>} : vector<8x8xf32>, vector<8x32xf32>, vector<8x32xf32> -> vector<8x32xf32>
    %85 = vector.extract_strided_slice %80 {offsets = [1, 0, 0], sizes = [1, 8, 8], strides = [1, 1, 1]} : vector<4x8x8xf32> to vector<1x8x8xf32>
    %86 = vector.shape_cast %85 : vector<1x8x8xf32> to vector<8x8xf32>
    %87 = vector.extract_strided_slice %36 {offsets = [8, 0], sizes = [8, 32], strides = [1, 1]} : vector<32x32xf32> to vector<8x32xf32>
    %cst_20 = arith.constant dense<0.000000e+00> : vector<8x32xf32>
    %88 = tpu.matmul %86, %87, %cst_20 {dimension_numbers = #tpu.dot_dimension_numbers<[1], [0], [0], [1], [0, 0, 1, 1], [], []>} : vector<8x8xf32>, vector<8x32xf32>, vector<8x32xf32> -> vector<8x32xf32>
    %89 = arith.addf %84, %88 : vector<8x32xf32>
    %90 = vector.extract_strided_slice %80 {offsets = [2, 0, 0], sizes = [1, 8, 8], strides = [1, 1, 1]} : vector<4x8x8xf32> to vector<1x8x8xf32>
    %91 = vector.shape_cast %90 : vector<1x8x8xf32> to vector<8x8xf32>
    %92 = vector.extract_strided_slice %36 {offsets = [16, 0], sizes = [8, 32], strides = [1, 1]} : vector<32x32xf32> to vector<8x32xf32>
    %cst_21 = arith.constant dense<0.000000e+00> : vector<8x32xf32>
    %93 = tpu.matmul %91, %92, %cst_21 {dimension_numbers = #tpu.dot_dimension_numbers<[1], [0], [0], [1], [0, 0, 1, 1], [], []>} : vector<8x8xf32>, vector<8x32xf32>, vector<8x32xf32> -> vector<8x32xf32>
    %94 = arith.addf %89, %93 : vector<8x32xf32>
    %95 = vector.extract_strided_slice %80 {offsets = [3, 0, 0], sizes = [1, 8, 8], strides = [1, 1, 1]} : vector<4x8x8xf32> to vector<1x8x8xf32>
    %96 = vector.shape_cast %95 : vector<1x8x8xf32> to vector<8x8xf32>
    %97 = vector.extract_strided_slice %36 {offsets = [24, 0], sizes = [8, 32], strides = [1, 1]} : vector<32x32xf32> to vector<8x32xf32>
    %cst_22 = arith.constant dense<0.000000e+00> : vector<8x32xf32>
    %98 = tpu.matmul %96, %97, %cst_22 {dimension_numbers = #tpu.dot_dimension_numbers<[1], [0], [0], [1], [0, 0, 1, 1], [], []>} : vector<8x8xf32>, vector<8x32xf32>, vector<8x32xf32> -> vector<8x32xf32>
    %99 = arith.addf %94, %98 : vector<8x32xf32>
    %100 = vector.extract_strided_slice %35 {offsets = [8, 0], sizes = [8, 96], strides = [1, 1]} : vector<16x96xf32> to vector<8x96xf32>
    %101 = vector.extract_strided_slice %100 {offsets = [0, 0], sizes = [8, 8], strides = [1, 1]} : vector<8x96xf32> to vector<8x8xf32>
    %102 = vector.extract_strided_slice %100 {offsets = [0, 8], sizes = [8, 8], strides = [1, 1]} : vector<8x96xf32> to vector<8x8xf32>
    %103 = vector.extract_strided_slice %100 {offsets = [0, 16], sizes = [8, 8], strides = [1, 1]} : vector<8x96xf32> to vector<8x8xf32>
    %104 = vector.extract_strided_slice %100 {offsets = [0, 24], sizes = [8, 8], strides = [1, 1]} : vector<8x96xf32> to vector<8x8xf32>
    %105 = vector.shape_cast %101 : vector<8x8xf32> to vector<1x8x8xf32>
    %106 = vector.shape_cast %102 : vector<8x8xf32> to vector<1x8x8xf32>
    %107 = vector.shape_cast %103 : vector<8x8xf32> to vector<1x8x8xf32>
    %108 = vector.shape_cast %104 : vector<8x8xf32> to vector<1x8x8xf32>
    %109 = tpu.concatenate %105, %106, %107, %108 in 0 : vector<1x8x8xf32>, vector<1x8x8xf32>, vector<1x8x8xf32>, vector<1x8x8xf32> -> vector<4x8x8xf32>
    %110 = vector.extract_strided_slice %100 {offsets = [0, 32], sizes = [8, 8], strides = [1, 1]} : vector<8x96xf32> to vector<8x8xf32>
    %111 = vector.extract_strided_slice %100 {offsets = [0, 40], sizes = [8, 8], strides = [1, 1]} : vector<8x96xf32> to vector<8x8xf32>
    %112 = vector.extract_strided_slice %100 {offsets = [0, 48], sizes = [8, 8], strides = [1, 1]} : vector<8x96xf32> to vector<8x8xf32>
    %113 = vector.extract_strided_slice %100 {offsets = [0, 56], sizes = [8, 8], strides = [1, 1]} : vector<8x96xf32> to vector<8x8xf32>
    %114 = vector.shape_cast %110 : vector<8x8xf32> to vector<1x8x8xf32>
    %115 = vector.shape_cast %111 : vector<8x8xf32> to vector<1x8x8xf32>
    %116 = vector.shape_cast %112 : vector<8x8xf32> to vector<1x8x8xf32>
    %117 = vector.shape_cast %113 : vector<8x8xf32> to vector<1x8x8xf32>
    %118 = tpu.concatenate %114, %115, %116, %117 in 0 : vector<1x8x8xf32>, vector<1x8x8xf32>, vector<1x8x8xf32>, vector<1x8x8xf32> -> vector<4x8x8xf32>
    %119 = vector.extract_strided_slice %100 {offsets = [0, 64], sizes = [8, 8], strides = [1, 1]} : vector<8x96xf32> to vector<8x8xf32>
    %120 = vector.extract_strided_slice %100 {offsets = [0, 72], sizes = [8, 8], strides = [1, 1]} : vector<8x96xf32> to vector<8x8xf32>
    %121 = vector.extract_strided_slice %100 {offsets = [0, 80], sizes = [8, 8], strides = [1, 1]} : vector<8x96xf32> to vector<8x8xf32>
    %122 = vector.extract_strided_slice %100 {offsets = [0, 88], sizes = [8, 8], strides = [1, 1]} : vector<8x96xf32> to vector<8x8xf32>
    %123 = vector.shape_cast %119 : vector<8x8xf32> to vector<1x8x8xf32>
    %124 = vector.shape_cast %120 : vector<8x8xf32> to vector<1x8x8xf32>
    %125 = vector.shape_cast %121 : vector<8x8xf32> to vector<1x8x8xf32>
    %126 = vector.shape_cast %122 : vector<8x8xf32> to vector<1x8x8xf32>
    %127 = tpu.concatenate %123, %124, %125, %126 in 0 : vector<1x8x8xf32>, vector<1x8x8xf32>, vector<1x8x8xf32>, vector<1x8x8xf32> -> vector<4x8x8xf32>
    "tpu.trace_start"() <{level = 10 : i32, message = "hqd,hkd->hqk"}> : () -> ()
    %cst_23 = arith.constant dense<0.000000e+00> : vector<4x8x8xf32>
    %128 = tpu.matmul %109, %118, %cst_23 {dimension_numbers = #tpu.dot_dimension_numbers<[2], [2], [1], [1], [0, 0, 0, 1, 1, 1], [0], [0]>} : vector<4x8x8xf32>, vector<4x8x8xf32>, vector<4x8x8xf32> -> vector<4x8x8xf32>
    "tpu.trace_stop"() : () -> ()
    %c1 = arith.constant 1 : index
    %c0_24 = arith.constant 0 : index
    %c0_25 = arith.constant 0 : index
    %129 = vector.load %arg1[%c1, %c0_24, %c0_25] : memref<2x8x8xf32, #tpu.memory_space<vmem>>, vector<1x8x8xf32>
    %130 = vector.shape_cast %129 : vector<1x8x8xf32> to vector<8x8xf32>
    %131 = vector.shape_cast %130 : vector<8x8xf32> to vector<1x8x8xf32>
    %132 = vector.broadcast %131 : vector<1x8x8xf32> to vector<4x8x8xf32>
    %133 = arith.addf %128, %132 : vector<4x8x8xf32>
    %cst_26 = arith.constant dense<0xFF800000> : vector<4x8xf32>
    %134 = vector.multi_reduction <maximumf>, %133, %cst_26 [2] : vector<4x8x8xf32> to vector<4x8xf32>
    %135 = vector.shape_cast %134 : vector<4x8xf32> to vector<4x8x1xf32>
    %136 = vector.broadcast %135 : vector<4x8x1xf32> to vector<4x8x8xf32>
    %137 = arith.subf %133, %136 : vector<4x8x8xf32>
    %138 = math.exp %137 : vector<4x8x8xf32>
    %cst_27 = arith.constant dense<0.000000e+00> : vector<4x8xf32>
    %139 = vector.multi_reduction <add>, %138, %cst_27 [2] : vector<4x8x8xf32> to vector<4x8xf32>
    %140 = vector.shape_cast %139 : vector<4x8xf32> to vector<4x8x1xf32>
    %141 = vector.broadcast %140 : vector<4x8x1xf32> to vector<4x8x8xf32>
    %142 = arith.divf %138, %141 : vector<4x8x8xf32>
    "tpu.trace_start"() <{level = 10 : i32, message = "hqk,hkd->hqd"}> : () -> ()
    %cst_28 = arith.constant dense<0.000000e+00> : vector<4x8x8xf32>
    %143 = tpu.matmul %142, %127, %cst_28 {dimension_numbers = #tpu.dot_dimension_numbers<[2], [1], [1], [2], [0, 0, 0, 1, 1, 2], [0], [0]>} : vector<4x8x8xf32>, vector<4x8x8xf32>, vector<4x8x8xf32> -> vector<4x8x8xf32>
    "tpu.trace_stop"() : () -> ()
    %144 = vector.extract_strided_slice %143 {offsets = [0, 0, 0], sizes = [1, 8, 8], strides = [1, 1, 1]} : vector<4x8x8xf32> to vector<1x8x8xf32>
    %145 = vector.shape_cast %144 : vector<1x8x8xf32> to vector<8x8xf32>
    %146 = vector.extract_strided_slice %36 {offsets = [0, 0], sizes = [8, 32], strides = [1, 1]} : vector<32x32xf32> to vector<8x32xf32>
    %cst_29 = arith.constant dense<0.000000e+00> : vector<8x32xf32>
    %147 = tpu.matmul %145, %146, %cst_29 {dimension_numbers = #tpu.dot_dimension_numbers<[1], [0], [0], [1], [0, 0, 1, 1], [], []>} : vector<8x8xf32>, vector<8x32xf32>, vector<8x32xf32> -> vector<8x32xf32>
    %148 = vector.extract_strided_slice %143 {offsets = [1, 0, 0], sizes = [1, 8, 8], strides = [1, 1, 1]} : vector<4x8x8xf32> to vector<1x8x8xf32>
    %149 = vector.shape_cast %148 : vector<1x8x8xf32> to vector<8x8xf32>
    %150 = vector.extract_strided_slice %36 {offsets = [8, 0], sizes = [8, 32], strides = [1, 1]} : vector<32x32xf32> to vector<8x32xf32>
    %cst_30 = arith.constant dense<0.000000e+00> : vector<8x32xf32>
    %151 = tpu.matmul %149, %150, %cst_30 {dimension_numbers = #tpu.dot_dimension_numbers<[1], [0], [0], [1], [0, 0, 1, 1], [], []>} : vector<8x8xf32>, vector<8x32xf32>, vector<8x32xf32> -> vector<8x32xf32>
    %152 = arith.addf %147, %151 : vector<8x32xf32>
    %153 = vector.extract_strided_slice %143 {offsets = [2, 0, 0], sizes = [1, 8, 8], strides = [1, 1, 1]} : vector<4x8x8xf32> to vector<1x8x8xf32>
    %154 = vector.shape_cast %153 : vector<1x8x8xf32> to vector<8x8xf32>
    %155 = vector.extract_strided_slice %36 {offsets = [16, 0], sizes = [8, 32], strides = [1, 1]} : vector<32x32xf32> to vector<8x32xf32>
    %cst_31 = arith.constant dense<0.000000e+00> : vector<8x32xf32>
    %156 = tpu.matmul %154, %155, %cst_31 {dimension_numbers = #tpu.dot_dimension_numbers<[1], [0], [0], [1], [0, 0, 1, 1], [], []>} : vector<8x8xf32>, vector<8x32xf32>, vector<8x32xf32> -> vector<8x32xf32>
    %157 = arith.addf %152, %156 : vector<8x32xf32>
    %158 = vector.extract_strided_slice %143 {offsets = [3, 0, 0], sizes = [1, 8, 8], strides = [1, 1, 1]} : vector<4x8x8xf32> to vector<1x8x8xf32>
    %159 = vector.shape_cast %158 : vector<1x8x8xf32> to vector<8x8xf32>
    %160 = vector.extract_strided_slice %36 {offsets = [24, 0], sizes = [8, 32], strides = [1, 1]} : vector<32x32xf32> to vector<8x32xf32>
    %cst_32 = arith.constant dense<0.000000e+00> : vector<8x32xf32>
    %161 = tpu.matmul %159, %160, %cst_32 {dimension_numbers = #tpu.dot_dimension_numbers<[1], [0], [0], [1], [0, 0, 1, 1], [], []>} : vector<8x8xf32>, vector<8x32xf32>, vector<8x32xf32> -> vector<8x32xf32>
    %162 = arith.addf %157, %161 : vector<8x32xf32>
    %163 = tpu.concatenate %99, %162 in 0 : vector<8x32xf32>, vector<8x32xf32> -> vector<16x32xf32>
    %164 = vector.broadcast %6 : vector<1x32xf32> to vector<16x32xf32>
    %165 = arith.addf %163, %164 : vector<16x32xf32>
    %166 = arith.addf %0, %165 : vector<16x32xf32>
    %cst_33 = arith.constant dense<0.000000e+00> : vector<16xf32>
    %167 = vector.multi_reduction <add>, %166, %cst_33 [1] : vector<16x32xf32> to vector<16xf32>
    %168 = vector.shape_cast %167 : vector<16xf32> to vector<16x1xf32>
    %cst_34 = arith.constant 3.200000e+01 : f32
    %169 = vector.broadcast %cst_34 : f32 to vector<16x1xf32>
    %170 = arith.divf %168, %169 : vector<16x1xf32>
    %171 = vector.broadcast %170 : vector<16x1xf32> to vector<16x32xf32>
    %172 = arith.subf %166, %171 : vector<16x32xf32>
    %173 = arith.mulf %172, %172 : vector<16x32xf32>
    %cst_35 = arith.constant dense<0.000000e+00> : vector<16xf32>
    %174 = vector.multi_reduction <add>, %173, %cst_35 [1] : vector<16x32xf32> to vector<16xf32>
    %175 = vector.shape_cast %174 : vector<16xf32> to vector<16x1xf32>
    %cst_36 = arith.constant 3.200000e+01 : f32
    %176 = vector.broadcast %cst_36 : f32 to vector<16x1xf32>
    %177 = arith.divf %175, %176 : vector<16x1xf32>
    %178 = vector.broadcast %170 : vector<16x1xf32> to vector<16x32xf32>
    %179 = arith.subf %166, %178 : vector<16x32xf32>
    %cst_37 = arith.constant 9.99999974E-6 : f32
    %180 = vector.broadcast %cst_37 : f32 to vector<16x1xf32>
    %181 = arith.addf %177, %180 : vector<16x1xf32>
    %182 = math.rsqrt %181 : vector<16x1xf32>
    %183 = vector.broadcast %182 : vector<16x1xf32> to vector<16x32xf32>
    %184 = arith.mulf %179, %183 : vector<16x32xf32>
    %185 = vector.broadcast %4 : vector<1x32xf32> to vector<16x32xf32>
    %186 = arith.mulf %184, %185 : vector<16x32xf32>
    %187 = vector.broadcast %5 : vector<1x32xf32> to vector<16x32xf32>
    %188 = arith.addf %186, %187 : vector<16x32xf32>
    %c0_38 = arith.constant 0 : index
    %c0_39 = arith.constant 0 : index
    %189 = vector.load %arg5[%c0_38, %c0_39] : memref<32x64xf32, #tpu.memory_space<vmem>>, vector<32x64xf32>
    %cst_40 = arith.constant dense<0.000000e+00> : vector<16x64xf32>
    %190 = tpu.matmul %188, %189, %cst_40 {dimension_numbers = #tpu.dot_dimension_numbers<[1], [0], [0], [1], [0, 0, 1, 1], [], []>} : vector<16x32xf32>, vector<32x64xf32>, vector<16x64xf32> -> vector<16x64xf32>
    %191 = vector.broadcast %9 : vector<1x64xf32> to vector<16x64xf32>
    %192 = arith.addf %190, %191 : vector<16x64xf32>
    %cst_41 = arith.constant 5.000000e-01 : f32
    %193 = vector.broadcast %cst_41 : f32 to vector<16x64xf32>
    %194 = arith.mulf %193, %192 : vector<16x64xf32>
    %cst_42 = arith.constant 4.471500e-02 : f32
    %195 = vector.broadcast %cst_42 : f32 to vector<16x64xf32>
    %196 = arith.mulf %195, %192 : vector<16x64xf32>
    %197 = arith.mulf %196, %192 : vector<16x64xf32>
    %198 = arith.mulf %197, %192 : vector<16x64xf32>
    %199 = arith.addf %192, %198 : vector<16x64xf32>
    %cst_43 = arith.constant 0.797884583 : f32
    %200 = vector.broadcast %cst_43 : f32 to vector<16x64xf32>
    %201 = arith.mulf %200, %199 : vector<16x64xf32>
    %202 = math.tanh %201 : vector<16x64xf32>
    %cst_44 = arith.constant 1.000000e+00 : f32
    %203 = vector.broadcast %cst_44 : f32 to vector<16x64xf32>
    %204 = arith.addf %203, %202 : vector<16x64xf32>
    %205 = arith.mulf %194, %204 : vector<16x64xf32>
    %c0_45 = arith.constant 0 : index
    %c0_46 = arith.constant 0 : index
    %206 = vector.load %arg6[%c0_45, %c0_46] : memref<64x32xf32, #tpu.memory_space<vmem>>, vector<64x32xf32>
    %cst_47 = arith.constant dense<0.000000e+00> : vector<16x32xf32>
    %207 = tpu.matmul %205, %206, %cst_47 {dimension_numbers = #tpu.dot_dimension_numbers<[1], [0], [0], [1], [0, 0, 1, 1], [], []>} : vector<16x64xf32>, vector<64x32xf32>, vector<16x32xf32> -> vector<16x32xf32>
    %208 = vector.broadcast %7 : vector<1x32xf32> to vector<16x32xf32>
    %209 = arith.addf %207, %208 : vector<16x32xf32>
    %210 = arith.addf %166, %209 : vector<16x32xf32>
    %c0_48 = arith.constant 0 : index
    %c0_49 = arith.constant 0 : index
    %211 = vector.load %arg7[%c0_48, %c0_49] : memref<16x32xf32, #tpu.memory_space<vmem>>, vector<16x32xf32>
    tpu.vector_store %arg7[%c0_48, %c0_49], %210 {strides = array<i32>} : memref<16x32xf32, #tpu.memory_space<vmem>>, vector<16x32xf32>,
    return
  }
}

</mosaic_0001>

<llo_original>
// kernel: tpu_custom_call.1
$region0: #{tpu_custom_call.1}
  #allocation0 [shape = 'u32[]', space=smem, size = 0x4, offset = 0x4, fixed_abs, tag = 'smem constant byte address 0x4 - core index']
  #allocation1 [shape = 'u32[144,128]{1,0:T(1,128)}', space=vmem, size = 0x12000, scoped, tag = 'internal scratch']
  %s0 = inlined_call_operand.hbm [shape: f32[16,32], index: 0, kind: input, shape index: {}]
  %s1 = inlined_call_operand.hbm [shape: f32[2,8,8], index: 1, kind: input, shape index: {}]
  %s2 = inlined_call_operand.hbm [shape: f32[8,128], index: 2, kind: input, shape index: {}]
  %s3 = inlined_call_operand.vmem [shape: f32[32,96], index: 3, kind: input, shape index: {}]
  %s4 = inlined_call_operand.vmem [shape: f32[32,32], index: 4, kind: input, shape index: {}]
  %s5 = inlined_call_operand.vmem [shape: f32[32,64], index: 5, kind: input, shape index: {}]
  %s6 = inlined_call_operand.vmem [shape: f32[64,32], index: 6, kind: input, shape index: {}]
  %s7 = inlined_call_operand.hbm [shape: f32[16,32], index: 7, kind: output, shape index: {}]
  %s8 = sld [smem:[#allocation0]]
  $region50: #{tpu_custom_call.1} parent=0
    _
  %s10 = ssub.s32 1, %s8
  %s11 = scalar_select 0, %s10, %s8
  $region1: #{tpu_custom_call.1} parent=0
    #allocation2 [shape = 'u8[8192]{0}', space=vmem, size = 0x2000, scoped, tag = 'input window, operand 0, single buffered']
    #allocation3 [shape = 's32[1]{0}', space=sflag, size = 0x4, scoped, tag = 'scoped memory for tpu_custom_call.1']
    #allocation4 [shape = 's32[1]{0}', space=sflag, size = 0x4, scoped, tag = 'scoped memory for tpu_custom_call.1']
    #allocation5 [shape = 'u8[8192]{0}', space=vmem, size = 0x2000, scoped, tag = 'input window, operand 1, single buffered']
    #allocation6 [shape = 's32[1]{0}', space=sflag, size = 0x4, scoped, tag = 'scoped memory for tpu_custom_call.1']
    #allocation7 [shape = 'u8[4096]{0}', space=vmem, size = 0x1000, scoped, tag = 'input window, operand 2, single buffered']
    #allocation8 [shape = 'u8[8192]{0}', space=vmem, size = 0x2000, scoped, tag = 'output window, operand 0, single buffered']
    %12 = vsyncpa [#allocation3], 0
    %13 = vsyncpa [#allocation6], 0
    %14 = vsyncpa [#allocation4], 0
    // Predicated region
    $region2: #{tpu_custom_call.1} parent=1 // pred_check
      _
    $region3: #{tpu_custom_call.1} parent=1 // pred_check_branch
      %16 = sbr.rel (0) target = $region5
    $region4: #{tpu_custom_call.1} parent=1 // pred_region
      %s18 = ssub.s32 256, 256
      %19 = vsyncadd [#allocation3], %s18
      %s20 = sshll.u32 [#allocation2], 4
      %s21 = int_to_ptr.vmem [resolvable:$true] %s20
      %26 = dma.hbm_to_vmem [thread:$0]  %s0, 256, %s21, [#allocation3], 128, 128, 8
    $region5: #{tpu_custom_call.1} parent=1 // pred_fallthru
      _
    // Predicated region
    $region6: #{tpu_custom_call.1} parent=1 // pred_check
      _
    $region7: #{tpu_custom_call.1} parent=1 // pred_check_branch
      %28 = sbr.rel (0) target = $region9
    $region8: #{tpu_custom_call.1} parent=1 // pred_region
      %s30 = ssub.s32 256, 256
      %31 = vsyncadd [#allocation6], %s30
      %s32 = sshll.u32 [#allocation5], 4
      %s33 = int_to_ptr.vmem [resolvable:$true] %s32
      %38 = dma.hbm_to_vmem [thread:$0]  %s1, 256, %s33, [#allocation6], 128, 128, 8
    $region9: #{tpu_custom_call.1} parent=1 // pred_fallthru
      _
    // Predicated region
    $region10: #{tpu_custom_call.1} parent=1 // pred_check
      _
    $region11: #{tpu_custom_call.1} parent=1 // pred_check_branch
      %40 = sbr.rel (0) target = $region13
    $region12: #{tpu_custom_call.1} parent=1 // pred_region
      %s42 = ssub.s32 128, 128
      %43 = vsyncadd [#allocation6], %s42
      %s45 = sshll.u32 [#allocation7], 4
      %s46 = int_to_ptr.vmem [resolvable:$true] %s45
      %48 = dma.hbm_to_vmem [thread:$0]  %s2, 128, %s46, [#allocation6]
    $region13: #{tpu_custom_call.1} parent=1 // pred_fallthru
      _
    // Predicated region
    $region14: #{tpu_custom_call.1} parent=1 // pred_check
      _
    $region15: #{tpu_custom_call.1} parent=1 // pred_check_branch
      %50 = sbr.rel (0) target = $region17
    $region16: #{tpu_custom_call.1} parent=1 // pred_region
      _
    $region17: #{tpu_custom_call.1} parent=1 // pred_fallthru
      _
    // Predicated region
    $region18: #{tpu_custom_call.1} parent=1 // pred_check
      _
    $region19: #{tpu_custom_call.1} parent=1 // pred_check_branch
      %52 = sbr.rel (0) target = $region21
    $region20: #{tpu_custom_call.1} parent=1 // pred_region
      _
    $region21: #{tpu_custom_call.1} parent=1 // pred_fallthru
      _
    // Predicated region
    $region22: #{tpu_custom_call.1} parent=1 // pred_check
      _
    $region23: #{tpu_custom_call.1} parent=1 // pred_check_branch
      %54 = sbr.rel (0) target = $region25
    $region24: #{tpu_custom_call.1} parent=1 // pred_region
      _
    $region25: #{tpu_custom_call.1} parent=1 // pred_fallthru
      _
    // Predicated region
    $region26: #{tpu_custom_call.1} parent=1 // pred_check
      _
    $region27: #{tpu_custom_call.1} parent=1 // pred_check_branch
      %56 = sbr.rel (0) target = $region29
    $region28: #{tpu_custom_call.1} parent=1 // pred_region
      _
    $region29: #{tpu_custom_call.1} parent=1 // pred_fallthru
      _
    // Predicated region
    $region30: #{tpu_custom_call.1} parent=1 // pred_check
      _
    $region31: #{tpu_custom_call.1} parent=1 // pred_check_branch
      %58 = sbr.rel (0) target = $region33
    $region32: #{tpu_custom_call.1} parent=1 // pred_region
      %59 = dma.done [#allocation3], 256
    $region33: #{tpu_custom_call.1} parent=1 // pred_fallthru
      _
    // Predicated region
    $region34: #{tpu_custom_call.1} parent=1 // pred_check
      _
    $region35: #{tpu_custom_call.1} parent=1 // pred_check_branch
      %61 = sbr.rel (0) target = $region37
    $region36: #{tpu_custom_call.1} parent=1 // pred_region
      %62 = dma.done [#allocation6], 256
    $region37: #{tpu_custom_call.1} parent=1 // pred_fallthru
      _
    // Predicated region
    $region38: #{tpu_custom_call.1} parent=1 // pred_check
      _
    $region39: #{tpu_custom_call.1} parent=1 // pred_check_branch
      %64 = sbr.rel (0) target = $region41
    $region40: #{tpu_custom_call.1} parent=1 // pred_region
      %65 = dma.done [#allocation6], 128
    $region41: #{tpu_custom_call.1} parent=1 // pred_fallthru
      _
    %v66 = vld [vmem:[#allocation2] sm:$0xff]
    %v67 = vld [vmem:[#allocation2 + $0x8] sm:$0xff]
    %v68 = vld [vmem:[#allocation7] sm:$0xff]
    %vm69 = vcmask 261120
    %v70 = vsel %vm69, %v66, 0.0
    %71 = vadd.xlane.f32.xlu0 %v70
    %v72 = vpop.xlane.xlu0 %71
    %v73 = vsel %vm69, %v67, 0.0
    %74 = vadd.xlane.f32.xlu0 %v73
    %v75 = vpop.xlane.xlu0 %74
    %v76 = vrcp.pop 32.0
    %v77 = vmul.f32 %v72, %v76
    %v78 = vmul.f32 %v75, %v76
    %v79 = vsub.f32 %v66, %v77
    %v80 = vsub.f32 %v67, %v78
    %v81 = vmul.f32 %v79, %v79
    %v82 = vmul.f32 %v80, %v80
    %v83 = vsel %vm69, %v81, 0.0
    %84 = vadd.xlane.f32.xlu0 %v83
    %v85 = vpop.xlane.xlu0 %84
    %v86 = vsel %vm69, %v82, 0.0
    %87 = vadd.xlane.f32.xlu0 %v86
    %v88 = vpop.xlane.xlu0 %87
    %v89 = vmul.f32 %v85, %v76
    %v90 = vmul.f32 %v88, %v76
    %v91 = vadd.f32 %v89, 1e-05
    %v92 = vadd.f32 %v90, 1e-05
    %v93 = vrsqrt.pop %v91
    %v94 = vrsqrt.pop %v92
    %v95 = vmul.f32 %v79, %v93
    %v96 = vmul.f32 %v80, %v94
    %v97 = vlaneseq
    %v98 = vshrl.u32 %v97, 7
    %v99 = vsub.s32 0, %v98
    %v100 = vrot.slane %v68, %v99
    %v101 = vmul.f32 %v95, %v100
    %v102 = vmul.f32 %v96, %v100
    %v103 = vlaneseq
    %v104 = vshrl.u32 %v103, 7
    %v105 = vsub.s32 1, %v104
    %v106 = vrot.slane %v68, %v105
    %v107 = vadd.f32 %v101, %v106
    %v108 = vadd.f32 %v102, %v106
    %v109 = vld [vmem:[%s3] sm:$0xff]
    %v110 = vld [vmem:[%s3 + $0x8] sm:$0xff]
    %v111 = vld [vmem:[%s3 + $0x10] sm:$0xff]
    %v112 = vld [vmem:[%s3 + $0x18] sm:$0xff]
    %v113 = vlaneseq
    %v114 = vshrl.u32 %v113, 7
    %v115 = vsub.s32 6, %v114
    %v116 = vrot.slane %v68, %v115
    %v118 = vsel %vm69, %v107, 0
    %v121 = vsel %vm69, %v108, 0
    %123 = vmatprep.subr.mxu0 0.0
    %124 = vmatpush1.msra.mxu0 0.0
    %125 = vmatprep.subr.mxu0 0.0
    %126 = vmatpush1.msra.mxu0 0.0
    %127 = vmatprep.subr.mxu0 0.0
    %128 = vmatpush1.msra.mxu0 0.0
    %129 = vmatprep.subr.mxu0 0.0
    %130 = vmatpush1.msra.mxu0 0.0
    %131 = vmatprep.subr.mxu0 0.0
    %132 = vmatpush1.msra.mxu0 0.0
    %133 = vmatprep.subr.mxu0 0.0
    %134 = vmatpush1.msra.mxu0 0.0
    %135 = vmatprep.subr.mxu0 0.0
    %136 = vmatpush1.msra.mxu0 0.0
    %137 = vmatprep.subr.mxu0 0.0
    %138 = vmatpush1.msra.mxu0 0.0
    %139 = vmatprep.subr.mxu0 0.0
    %140 = vmatpush1.msra.mxu0 0.0
    %141 = vmatprep.subr.mxu0 0.0
    %142 = vmatpush1.msra.mxu0 0.0
    %143 = vmatprep.subr.mxu0 0.0
    %144 = vmatpush1.msra.mxu0 0.0
    %145 = vmatprep.subr.mxu0 0.0
    %146 = vmatpush1.msra.mxu0 0.0
    %147 = vmatprep.subr.mxu0 0.0
    %148 = vmatpush1.msra.mxu0 %v112
    %149 = vmatprep.subr.mxu0 0.0
    %150 = vmatpush1.msra.mxu0 %v111
    %151 = vmatprep.subr.mxu0 0.0
    %152 = vmatpush1.msra.mxu0 %v110
    %153 = vmatprep.subr.mxu0 0.0
    %154 = vmatpush1.msra.mxu0 %v109
    %155 = vmatprep.subr.mxu0 0.0
    %156 = vmatpush2.msra.mxu0 0.0
    %157 = vmatprep.subr.mxu0 0.0
    %158 = vmatpush2.msra.mxu0 0.0
    %159 = vmatprep.subr.mxu0 0.0
    %160 = vmatpush2.msra.mxu0 0.0
    %161 = vmatprep.subr.mxu0 0.0
    %162 = vmatpush2.msra.mxu0 0.0
    %163 = vmatprep.subr.mxu0 0.0
    %164 = vmatpush2.msra.mxu0 0.0
    %165 = vmatprep.subr.mxu0 0.0
    %166 = vmatpush2.msra.mxu0 0.0
    %167 = vmatprep.subr.mxu0 0.0
    %168 = vmatpush2.msra.mxu0 0.0
    %169 = vmatprep.subr.mxu0 0.0
    %170 = vmatpush2.msra.mxu0 0.0
    %171 = vmatprep.subr.mxu0 0.0
    %172 = vmatpush2.msra.mxu0 0.0
    %173 = vmatprep.subr.mxu0 0.0
    %174 = vmatpush2.msra.mxu0 0.0
    %175 = vmatprep.subr.mxu0 0.0
    %176 = vmatpush2.msra.mxu0 0.0
    %177 = vmatprep.subr.mxu0 0.0
    %178 = vmatpush2.msra.mxu0 0.0
    %179 = vmatprep.subr.mxu0 0.0
    %180 = vmatpush2.msra.mxu0 0.0
    %181 = vmatprep.subr.mxu0 0.0
    %182 = vmatpush2.msra.mxu0 0.0
    %183 = vmatprep.subr.mxu0 0.0
    %184 = vmatpush2.msra.mxu0 0.0
    %185 = vmatprep.subr.mxu0 0.0
    %186 = vmatpush2.msra.mxu0 0.0
    %187 = vmatprep.mubr.f32.mxu0 0.0
    %188 = vmatmul.mubr.f32.gmra.mxu0 %v118
    %v189 = vpop.f32.mrf.mxu0
    %v190 = vadd.f32 %v116, %v189
    %v191 = vpop.f32.mrf.mxu0
    %192 = vmatprep.mubr.f32.mxu0 0.0
    %193 = vmatmul.mubr.f32.gmra.mxu0 %v121
    %v194 = vpop.f32.mrf.mxu0
    %v195 = vadd.f32 %v116, %v194
    %v196 = vpop.f32.mrf.mxu0
    %197 = vdwg.mxu0
    %v198 = vld [vmem:[%s4] sm:$0xff]
    %v199 = vld [vmem:[%s4 + $0x8] sm:$0xff]
    %v200 = vld [vmem:[%s4 + $0x10] sm:$0xff]
    %v201 = vld [vmem:[%s4 + $0x18] sm:$0xff]
    %203 = vrot.lane.b32.xlu0 %v190, 120
    %v204 = vpop.permute.xlu0 %203
    %205 = vrot.lane.b32.xlu0 %v190, 112
    %v206 = vpop.permute.xlu0 %205
    %207 = vrot.lane.b32.xlu0 %v190, 104
    %v208 = vpop.permute.xlu0 %207
    %v209 = vld [vmem:[#allocation5] sm:$0xff]
    %210 = vrot.lane.b32.xlu0 %v190, 96
    %v211 = vpop.permute.xlu0 %210
    %vm212 = vcmask 64512
    %v213 = vsel %vm212, %v190, 0
    %v215 = vsel %vm212, %v211, 0
    %217 = vmatprep.subr.mxu0 0.0
    %218 = vmatpush1.xpose.msra.mxu0 0.0
    %219 = vmatprep.subr.mxu0 0.0
    %220 = vmatpush1.xpose.msra.mxu0 0.0
    %221 = vmatprep.subr.mxu0 0.0
    %222 = vmatpush1.xpose.msra.mxu0 0.0
    %223 = vmatprep.subr.mxu0 0.0
    %224 = vmatpush1.xpose.msra.mxu0 0.0
    %225 = vmatprep.subr.mxu0 0.0
    %226 = vmatpush1.xpose.msra.mxu0 0.0
    %227 = vmatprep.subr.mxu0 0.0
    %228 = vmatpush1.xpose.msra.mxu0 0.0
    %229 = vmatprep.subr.mxu0 0.0
    %230 = vmatpush1.xpose.msra.mxu0 0.0
    %231 = vmatprep.subr.mxu0 0.0
    %232 = vmatpush1.xpose.msra.mxu0 0.0
    %233 = vmatprep.subr.mxu0 0.0
    %234 = vmatpush1.xpose.msra.mxu0 0.0
    %235 = vmatprep.subr.mxu0 0.0
    %236 = vmatpush1.xpose.msra.mxu0 0.0
    %237 = vmatprep.subr.mxu0 0.0
    %238 = vmatpush1.xpose.msra.mxu0 0.0
    %239 = vmatprep.subr.mxu0 0.0
    %240 = vmatpush1.xpose.msra.mxu0 0.0
    %241 = vmatprep.subr.mxu0 0.0
    %242 = vmatpush1.xpose.msra.mxu0 0.0
    %243 = vmatprep.subr.mxu0 0.0
    %244 = vmatpush1.xpose.msra.mxu0 0.0
    %245 = vmatprep.subr.mxu0 0.0
    %246 = vmatpush1.xpose.msra.mxu0 0.0
    %247 = vmatprep.subr.mxu0 0.0
    %248 = vmatpush1.xpose.msra.mxu0 %v215
    %249 = vmatprep.subr.mxu0 0.0
    %250 = vmatpush2.xpose.msra.mxu0 0.0
    %251 = vmatprep.subr.mxu0 0.0
    %252 = vmatpush2.xpose.msra.mxu0 0.0
    %253 = vmatprep.subr.mxu0 0.0
    %254 = vmatpush2.xpose.msra.mxu0 0.0
    %255 = vmatprep.subr.mxu0 0.0
    %256 = vmatpush2.xpose.msra.mxu0 0.0
    %257 = vmatprep.subr.mxu0 0.0
    %258 = vmatpush2.xpose.msra.mxu0 0.0
    %259 = vmatprep.subr.mxu0 0.0
    %260 = vmatpush2.xpose.msra.mxu0 0.0
    %261 = vmatprep.subr.mxu0 0.0
    %262 = vmatpush2.xpose.msra.mxu0 0.0
    %263 = vmatprep.subr.mxu0 0.0
    %264 = vmatpush2.xpose.msra.mxu0 0.0
    %265 = vmatprep.subr.mxu0 0.0
    %266 = vmatpush2.xpose.msra.mxu0 0.0
    %267 = vmatprep.subr.mxu0 0.0
    %268 = vmatpush2.xpose.msra.mxu0 0.0
    %269 = vmatprep.subr.mxu0 0.0
    %270 = vmatpush2.xpose.msra.mxu0 0.0
    %271 = vmatprep.subr.mxu0 0.0
    %272 = vmatpush2.xpose.msra.mxu0 0.0
    %273 = vmatprep.subr.mxu0 0.0
    %274 = vmatpush2.xpose.msra.mxu0 0.0
    %275 = vmatprep.subr.mxu0 0.0
    %276 = vmatpush2.xpose.msra.mxu0 0.0
    %277 = vmatprep.subr.mxu0 0.0
    %278 = vmatpush2.xpose.msra.mxu0 0.0
    %279 = vmatprep.subr.mxu0 0.0
    %280 = vmatpush2.xpose.msra.mxu0 0.0
    %281 = vmatprep.mubr.f32.mxu0 0.0
    %282 = vmatmul.mubr.f32.gmra.mxu0 %v213
    %v283 = vpop.f32.mrf.mxu0
    %v284 = vadd.f32 %v209, %v283
    %v285 = vpop.f32.mrf.mxu0
    %286 = vdwg.mxu0
    %287 = vrot.lane.b32.xlu0 %v204, 96
    %v288 = vpop.permute.xlu0 %287
    %v289 = vsel %vm212, %v204, 0
    %v291 = vsel %vm212, %v288, 0
    %293 = vmatprep.subr.mxu0 0.0
    %294 = vmatpush1.xpose.msra.mxu0 0.0
    %295 = vmatprep.subr.mxu0 0.0
    %296 = vmatpush1.xpose.msra.mxu0 0.0
    %297 = vmatprep.subr.mxu0 0.0
    %298 = vmatpush1.xpose.msra.mxu0 0.0
    %299 = vmatprep.subr.mxu0 0.0
    %300 = vmatpush1.xpose.msra.mxu0 0.0
    %301 = vmatprep.subr.mxu0 0.0
    %302 = vmatpush1.xpose.msra.mxu0 0.0
    %303 = vmatprep.subr.mxu0 0.0
    %304 = vmatpush1.xpose.msra.mxu0 0.0
    %305 = vmatprep.subr.mxu0 0.0
    %306 = vmatpush1.xpose.msra.mxu0 0.0
    %307 = vmatprep.subr.mxu0 0.0
    %308 = vmatpush1.xpose.msra.mxu0 0.0
    %309 = vmatprep.subr.mxu0 0.0
    %310 = vmatpush1.xpose.msra.mxu0 0.0
    %311 = vmatprep.subr.mxu0 0.0
    %312 = vmatpush1.xpose.msra.mxu0 0.0
    %313 = vmatprep.subr.mxu0 0.0
    %314 = vmatpush1.xpose.msra.mxu0 0.0
    %315 = vmatprep.subr.mxu0 0.0
    %316 = vmatpush1.xpose.msra.mxu0 0.0
    %317 = vmatprep.subr.mxu0 0.0
    %318 = vmatpush1.xpose.msra.mxu0 0.0
    %319 = vmatprep.subr.mxu0 0.0
    %320 = vmatpush1.xpose.msra.mxu0 0.0
    %321 = vmatprep.subr.mxu0 0.0
    %322 = vmatpush1.xpose.msra.mxu0 0.0
    %323 = vmatprep.subr.mxu0 0.0
    %324 = vmatpush1.xpose.msra.mxu0 %v291
    %325 = vmatprep.subr.mxu0 0.0
    %326 = vmatpush2.xpose.msra.mxu0 0.0
    %327 = vmatprep.subr.mxu0 0.0
    %328 = vmatpush2.xpose.msra.mxu0 0.0
    %329 = vmatprep.subr.mxu0 0.0
    %330 = vmatpush2.xpose.msra.mxu0 0.0
    %331 = vmatprep.subr.mxu0 0.0
    %332 = vmatpush2.xpose.msra.mxu0 0.0
    %333 = vmatprep.subr.mxu0 0.0
    %334 = vmatpush2.xpose.msra.mxu0 0.0
    %335 = vmatprep.subr.mxu0 0.0
    %336 = vmatpush2.xpose.msra.mxu0 0.0
    %337 = vmatprep.subr.mxu0 0.0
    %338 = vmatpush2.xpose.msra.mxu0 0.0
    %339 = vmatprep.subr.mxu0 0.0
    %340 = vmatpush2.xpose.msra.mxu0 0.0
    %341 = vmatprep.subr.mxu0 0.0
    %342 = vmatpush2.xpose.msra.mxu0 0.0
    %343 = vmatprep.subr.mxu0 0.0
    %344 = vmatpush2.xpose.msra.mxu0 0.0
    %345 = vmatprep.subr.mxu0 0.0
    %346 = vmatpush2.xpose.msra.mxu0 0.0
    %347 = vmatprep.subr.mxu0 0.0
    %348 = vmatpush2.xpose.msra.mxu0 0.0
    %349 = vmatprep.subr.mxu0 0.0
    %350 = vmatpush2.xpose.msra.mxu0 0.0
    %351 = vmatprep.subr.mxu0 0.0
    %352 = vmatpush2.xpose.msra.mxu0 0.0
    %353 = vmatprep.subr.mxu0 0.0
    %354 = vmatpush2.xpose.msra.mxu0 0.0
    %355 = vmatprep.subr.mxu0 0.0
    %356 = vmatpush2.xpose.msra.mxu0 0.0
    %357 = vmatprep.mubr.f32.mxu0 0.0
    %358 = vmatmul.mubr.f32.gmra.mxu0 %v289
    %v359 = vpop.f32.mrf.mxu0
    %v360 = vadd.f32 %v209, %v359
    %v361 = vpop.f32.mrf.mxu0
    %362 = vdwg.mxu0
    %363 = vrot.lane.b32.xlu0 %v206, 96
    %v364 = vpop.permute.xlu0 %363
    %v365 = vsel %vm212, %v206, 0
    %v367 = vsel %vm212, %v364, 0
    %369 = vmatprep.subr.mxu0 0.0
    %370 = vmatpush1.xpose.msra.mxu0 0.0
    %371 = vmatprep.subr.mxu0 0.0
    %372 = vmatpush1.xpose.msra.mxu0 0.0
    %373 = vmatprep.subr.mxu0 0.0
    %374 = vmatpush1.xpose.msra.mxu0 0.0
    %375 = vmatprep.subr.mxu0 0.0
    %376 = vmatpush1.xpose.msra.mxu0 0.0
    %377 = vmatprep.subr.mxu0 0.0
    %378 = vmatpush1.xpose.msra.mxu0 0.0
    %379 = vmatprep.subr.mxu0 0.0
    %380 = vmatpush1.xpose.msra.mxu0 0.0
    %381 = vmatprep.subr.mxu0 0.0
    %382 = vmatpush1.xpose.msra.mxu0 0.0
    %383 = vmatprep.subr.mxu0 0.0
    %384 = vmatpush1.xpose.msra.mxu0 0.0
    %385 = vmatprep.subr.mxu0 0.0
    %386 = vmatpush1.xpose.msra.mxu0 0.0
    %387 = vmatprep.subr.mxu0 0.0
    %388 = vmatpush1.xpose.msra.mxu0 0.0
    %389 = vmatprep.subr.mxu0 0.0
    %390 = vmatpush1.xpose.msra.mxu0 0.0
    %391 = vmatprep.subr.mxu0 0.0
    %392 = vmatpush1.xpose.msra.mxu0 0.0
    %393 = vmatprep.subr.mxu0 0.0
    %394 = vmatpush1.xpose.msra.mxu0 0.0
    %395 = vmatprep.subr.mxu0 0.0
    %396 = vmatpush1.xpose.msra.mxu0 0.0
    %397 = vmatprep.subr.mxu0 0.0
    %398 = vmatpush1.xpose.msra.mxu0 0.0
    %399 = vmatprep.subr.mxu0 0.0
    %400 = vmatpush1.xpose.msra.mxu0 %v367
    %401 = vmatprep.subr.mxu0 0.0
    %402 = vmatpush2.xpose.msra.mxu0 0.0
    %403 = vmatprep.subr.mxu0 0.0
    %404 = vmatpush2.xpose.msra.mxu0 0.0
    %405 = vmatprep.subr.mxu0 0.0
    %406 = vmatpush2.xpose.msra.mxu0 0.0
    %407 = vmatprep.subr.mxu0 0.0
    %408 = vmatpush2.xpose.msra.mxu0 0.0
    %409 = vmatprep.subr.mxu0 0.0
    %410 = vmatpush2.xpose.msra.mxu0 0.0
    %411 = vmatprep.subr.mxu0 0.0
    %412 = vmatpush2.xpose.msra.mxu0 0.0
    %413 = vmatprep.subr.mxu0 0.0
    %414 = vmatpush2.xpose.msra.mxu0 0.0
    %415 = vmatprep.subr.mxu0 0.0
    %416 = vmatpush2.xpose.msra.mxu0 0.0
    %417 = vmatprep.subr.mxu0 0.0
    %418 = vmatpush2.xpose.msra.mxu0 0.0
    %419 = vmatprep.subr.mxu0 0.0
    %420 = vmatpush2.xpose.msra.mxu0 0.0
    %421 = vmatprep.subr.mxu0 0.0
    %422 = vmatpush2.xpose.msra.mxu0 0.0
    %423 = vmatprep.subr.mxu0 0.0
    %424 = vmatpush2.xpose.msra.mxu0 0.0
    %425 = vmatprep.subr.mxu0 0.0
    %426 = vmatpush2.xpose.msra.mxu0 0.0
    %427 = vmatprep.subr.mxu0 0.0
    %428 = vmatpush2.xpose.msra.mxu0 0.0
    %429 = vmatprep.subr.mxu0 0.0
    %430 = vmatpush2.xpose.msra.mxu0 0.0
    %431 = vmatprep.subr.mxu0 0.0
    %432 = vmatpush2.xpose.msra.mxu0 0.0
    %433 = vmatprep.mubr.f32.mxu0 0.0
    %434 = vmatmul.mubr.f32.gmra.mxu0 %v365
    %v435 = vpop.f32.mrf.mxu0
    %v436 = vadd.f32 %v209, %v435
    %v437 = vpop.f32.mrf.mxu0
    %438 = vdwg.mxu0
    %439 = vrot.lane.b32.xlu0 %v208, 96
    %v440 = vpop.permute.xlu0 %439
    %v441 = vsel %vm212, %v208, 0
    %v443 = vsel %vm212, %v440, 0
    %445 = vmatprep.subr.mxu0 0.0
    %446 = vmatpush1.xpose.msra.mxu0 0.0
    %447 = vmatprep.subr.mxu0 0.0
    %448 = vmatpush1.xpose.msra.mxu0 0.0
    %449 = vmatprep.subr.mxu0 0.0
    %450 = vmatpush1.xpose.msra.mxu0 0.0
    %451 = vmatprep.subr.mxu0 0.0
    %452 = vmatpush1.xpose.msra.mxu0 0.0
    %453 = vmatprep.subr.mxu0 0.0
    %454 = vmatpush1.xpose.msra.mxu0 0.0
    %455 = vmatprep.subr.mxu0 0.0
    %456 = vmatpush1.xpose.msra.mxu0 0.0
    %457 = vmatprep.subr.mxu0 0.0
    %458 = vmatpush1.xpose.msra.mxu0 0.0
    %459 = vmatprep.subr.mxu0 0.0
    %460 = vmatpush1.xpose.msra.mxu0 0.0
    %461 = vmatprep.subr.mxu0 0.0
    %462 = vmatpush1.xpose.msra.mxu0 0.0
    %463 = vmatprep.subr.mxu0 0.0
    %464 = vmatpush1.xpose.msra.mxu0 0.0
    %465 = vmatprep.subr.mxu0 0.0
    %466 = vmatpush1.xpose.msra.mxu0 0.0
    %467 = vmatprep.subr.mxu0 0.0
    %468 = vmatpush1.xpose.msra.mxu0 0.0
    %469 = vmatprep.subr.mxu0 0.0
    %470 = vmatpush1.xpose.msra.mxu0 0.0
    %471 = vmatprep.subr.mxu0 0.0
    %472 = vmatpush1.xpose.msra.mxu0 0.0
    %473 = vmatprep.subr.mxu0 0.0
    %474 = vmatpush1.xpose.msra.mxu0 0.0
    %475 = vmatprep.subr.mxu0 0.0
    %476 = vmatpush1.xpose.msra.mxu0 %v443
    %477 = vmatprep.subr.mxu0 0.0
    %478 = vmatpush2.xpose.msra.mxu0 0.0
    %479 = vmatprep.subr.mxu0 0.0
    %480 = vmatpush2.xpose.msra.mxu0 0.0
    %481 = vmatprep.subr.mxu0 0.0
    %482 = vmatpush2.xpose.msra.mxu0 0.0
    %483 = vmatprep.subr.mxu0 0.0
    %484 = vmatpush2.xpose.msra.mxu0 0.0
    %485 = vmatprep.subr.mxu0 0.0
    %486 = vmatpush2.xpose.msra.mxu0 0.0
    %487 = vmatprep.subr.mxu0 0.0
    %488 = vmatpush2.xpose.msra.mxu0 0.0
    %489 = vmatprep.subr.mxu0 0.0
    %490 = vmatpush2.xpose.msra.mxu0 0.0
    %491 = vmatprep.subr.mxu0 0.0
    %492 = vmatpush2.xpose.msra.mxu0 0.0
    %493 = vmatprep.subr.mxu0 0.0
    %494 = vmatpush2.xpose.msra.mxu0 0.0
    %495 = vmatprep.subr.mxu0 0.0
    %496 = vmatpush2.xpose.msra.mxu0 0.0
    %497 = vmatprep.subr.mxu0 0.0
    %498 = vmatpush2.xpose.msra.mxu0 0.0
    %499 = vmatprep.subr.mxu0 0.0
    %500 = vmatpush2.xpose.msra.mxu0 0.0
    %501 = vmatprep.subr.mxu0 0.0
    %502 = vmatpush2.xpose.msra.mxu0 0.0
    %503 = vmatprep.subr.mxu0 0.0
    %504 = vmatpush2.xpose.msra.mxu0 0.0
    %505 = vmatprep.subr.mxu0 0.0
    %506 = vmatpush2.xpose.msra.mxu0 0.0
    %507 = vmatprep.subr.mxu0 0.0
    %508 = vmatpush2.xpose.msra.mxu0 0.0
    %509 = vmatprep.mubr.f32.mxu0 0.0
    %510 = vmatmul.mubr.f32.gmra.mxu0 %v441
    %v511 = vpop.f32.mrf.mxu0
    %v512 = vadd.f32 %v209, %v511
    %v513 = vpop.f32.mrf.mxu0
    %514 = vdwg.mxu0
    %v515 = vsel %vm212, %v284, -inf
    %516 = vmax.xlane.f32.xlu0 %v515
    %v517 = vpop.xlane.xlu0 %516
    %v518 = vsel %vm212, %v360, -inf
    %519 = vmax.xlane.f32.xlu0 %v518
    %v520 = vpop.xlane.xlu0 %519
    %v521 = vsel %vm212, %v436, -inf
    %522 = vmax.xlane.f32.xlu0 %v521
    %v523 = vpop.xlane.xlu0 %522
    %v524 = vsel %vm212, %v512, -inf
    %525 = vmax.xlane.f32.xlu0 %v524
    %v526 = vpop.xlane.xlu0 %525
    %v527 = vsub.f32 %v284, %v517
    %v528 = vsub.f32 %v360, %v520
    %v529 = vsub.f32 %v436, %v523
    %v530 = vsub.f32 %v512, %v526
    %v531 = vmul.f32 %v527, 1.442695
    %v532 = vpow.pop %v531
    %v533 = vmul.f32 %v528, 1.442695
    %v534 = vpow.pop %v533
    %v535 = vmul.f32 %v529, 1.442695
    %v536 = vpow.pop %v535
    %v537 = vmul.f32 %v530, 1.442695
    %v538 = vpow.pop %v537
    %v539 = vsel %vm212, %v532, 0.0
    %540 = vadd.xlane.f32.xlu0 %v539
    %v541 = vpop.xlane.xlu0 %540
    %v542 = vsel %vm212, %v534, 0.0
    %543 = vadd.xlane.f32.xlu0 %v542
    %v544 = vpop.xlane.xlu0 %543
    %v545 = vsel %vm212, %v536, 0.0
    %546 = vadd.xlane.f32.xlu0 %v545
    %v547 = vpop.xlane.xlu0 %546
    %v548 = vsel %vm212, %v538, 0.0
    %549 = vadd.xlane.f32.xlu0 %v548
    %v550 = vpop.xlane.xlu0 %549
    %v551 = vrcp.pop %v541
    %v552 = vmul.f32 %v532, %v551
    %v553 = vrcp.pop %v544
    %v554 = vmul.f32 %v534, %v553
    %v555 = vrcp.pop %v547
    %v556 = vmul.f32 %v536, %v555
    %v557 = vrcp.pop %v550
    %v558 = vmul.f32 %v538, %v557
    %559 = vrot.lane.b32.xlu0 %v190, 64
    %v560 = vpop.permute.xlu0 %559
    %v563 = vsel %vm212, %v552, 0
    %565 = vmatprep.subr.mxu0 0.0
    %566 = vmatpush1.msra.mxu0 0.0
    %567 = vmatprep.subr.mxu0 0.0
    %568 = vmatpush1.msra.mxu0 0.0
    %569 = vmatprep.subr.mxu0 0.0
    %570 = vmatpush1.msra.mxu0 0.0
    %571 = vmatprep.subr.mxu0 0.0
    %572 = vmatpush1.msra.mxu0 0.0
    %573 = vmatprep.subr.mxu0 0.0
    %574 = vmatpush1.msra.mxu0 0.0
    %575 = vmatprep.subr.mxu0 0.0
    %576 = vmatpush1.msra.mxu0 0.0
    %577 = vmatprep.subr.mxu0 0.0
    %578 = vmatpush1.msra.mxu0 0.0
    %579 = vmatprep.subr.mxu0 0.0
    %580 = vmatpush1.msra.mxu0 0.0
    %581 = vmatprep.subr.mxu0 0.0
    %582 = vmatpush1.msra.mxu0 0.0
    %583 = vmatprep.subr.mxu0 0.0
    %584 = vmatpush1.msra.mxu0 0.0
    %585 = vmatprep.subr.mxu0 0.0
    %586 = vmatpush1.msra.mxu0 0.0
    %587 = vmatprep.subr.mxu0 0.0
    %588 = vmatpush1.msra.mxu0 0.0
    %589 = vmatprep.subr.mxu0 0.0
    %590 = vmatpush1.msra.mxu0 0.0
    %591 = vmatprep.subr.mxu0 0.0
    %592 = vmatpush1.msra.mxu0 0.0
    %593 = vmatprep.subr.mxu0 0.0
    %594 = vmatpush1.msra.mxu0 0.0
    %595 = vmatprep.subr.mxu0 0.0
    %596 = vmatpush1.msra.mxu0 %v560
    %597 = vmatprep.subr.mxu0 0.0
    %598 = vmatpush2.msra.mxu0 0.0
    %599 = vmatprep.subr.mxu0 0.0
    %600 = vmatpush2.msra.mxu0 0.0
    %601 = vmatprep.subr.mxu0 0.0
    %602 = vmatpush2.msra.mxu0 0.0
    %603 = vmatprep.subr.mxu0 0.0
    %604 = vmatpush2.msra.mxu0 0.0
    %605 = vmatprep.subr.mxu0 0.0
    %606 = vmatpush2.msra.mxu0 0.0
    %607 = vmatprep.subr.mxu0 0.0
    %608 = vmatpush2.msra.mxu0 0.0
    %609 = vmatprep.subr.mxu0 0.0
    %610 = vmatpush2.msra.mxu0 0.0
    %611 = vmatprep.subr.mxu0 0.0
    %612 = vmatpush2.msra.mxu0 0.0
    %613 = vmatprep.subr.mxu0 0.0
    %614 = vmatpush2.msra.mxu0 0.0
    %615 = vmatprep.subr.mxu0 0.0
    %616 = vmatpush2.msra.mxu0 0.0
    %617 = vmatprep.subr.mxu0 0.0
    %618 = vmatpush2.msra.mxu0 0.0
    %619 = vmatprep.subr.mxu0 0.0
    %620 = vmatpush2.msra.mxu0 0.0
    %621 = vmatprep.subr.mxu0 0.0
    %622 = vmatpush2.msra.mxu0 0.0
    %623 = vmatprep.subr.mxu0 0.0
    %624 = vmatpush2.msra.mxu0 0.0
    %625 = vmatprep.subr.mxu0 0.0
    %626 = vmatpush2.msra.mxu0 0.0
    %627 = vmatprep.subr.mxu0 0.0
    %628 = vmatpush2.msra.mxu0 0.0
    %629 = vmatprep.mubr.f32.mxu0 0.0
    %630 = vmatmul.mubr.f32.gmra.mxu0 %v563
    %v631 = vpop.f32.mrf.mxu0
    %v632 = vadd.f32 0.0, %v631
    %v633 = vpop.f32.mrf.mxu0
    %634 = vdwg.mxu0
    %635 = vrot.lane.b32.xlu0 %v204, 64
    %v636 = vpop.permute.xlu0 %635
    %v639 = vsel %vm212, %v554, 0
    %641 = vmatprep.subr.mxu0 0.0
    %642 = vmatpush1.msra.mxu0 0.0
    %643 = vmatprep.subr.mxu0 0.0
    %644 = vmatpush1.msra.mxu0 0.0
    %645 = vmatprep.subr.mxu0 0.0
    %646 = vmatpush1.msra.mxu0 0.0
    %647 = vmatprep.subr.mxu0 0.0
    %648 = vmatpush1.msra.mxu0 0.0
    %649 = vmatprep.subr.mxu0 0.0
    %650 = vmatpush1.msra.mxu0 0.0
    %651 = vmatprep.subr.mxu0 0.0
    %652 = vmatpush1.msra.mxu0 0.0
    %653 = vmatprep.subr.mxu0 0.0
    %654 = vmatpush1.msra.mxu0 0.0
    %655 = vmatprep.subr.mxu0 0.0
    %656 = vmatpush1.msra.mxu0 0.0
    %657 = vmatprep.subr.mxu0 0.0
    %658 = vmatpush1.msra.mxu0 0.0
    %659 = vmatprep.subr.mxu0 0.0
    %660 = vmatpush1.msra.mxu0 0.0
    %661 = vmatprep.subr.mxu0 0.0
    %662 = vmatpush1.msra.mxu0 0.0
    %663 = vmatprep.subr.mxu0 0.0
    %664 = vmatpush1.msra.mxu0 0.0
    %665 = vmatprep.subr.mxu0 0.0
    %666 = vmatpush1.msra.mxu0 0.0
    %667 = vmatprep.subr.mxu0 0.0
    %668 = vmatpush1.msra.mxu0 0.0
    %669 = vmatprep.subr.mxu0 0.0
    %670 = vmatpush1.msra.mxu0 0.0
    %671 = vmatprep.subr.mxu0 0.0
    %672 = vmatpush1.msra.mxu0 %v636
    %673 = vmatprep.subr.mxu0 0.0
    %674 = vmatpush2.msra.mxu0 0.0
    %675 = vmatprep.subr.mxu0 0.0
    %676 = vmatpush2.msra.mxu0 0.0
    %677 = vmatprep.subr.mxu0 0.0
    %678 = vmatpush2.msra.mxu0 0.0
    %679 = vmatprep.subr.mxu0 0.0
    %680 = vmatpush2.msra.mxu0 0.0
    %681 = vmatprep.subr.mxu0 0.0
    %682 = vmatpush2.msra.mxu0 0.0
    %683 = vmatprep.subr.mxu0 0.0
    %684 = vmatpush2.msra.mxu0 0.0
    %685 = vmatprep.subr.mxu0 0.0
    %686 = vmatpush2.msra.mxu0 0.0
    %687 = vmatprep.subr.mxu0 0.0
    %688 = vmatpush2.msra.mxu0 0.0
    %689 = vmatprep.subr.mxu0 0.0
    %690 = vmatpush2.msra.mxu0 0.0
    %691 = vmatprep.subr.mxu0 0.0
    %692 = vmatpush2.msra.mxu0 0.0
    %693 = vmatprep.subr.mxu0 0.0
    %694 = vmatpush2.msra.mxu0 0.0
    %695 = vmatprep.subr.mxu0 0.0
    %696 = vmatpush2.msra.mxu0 0.0
    %697 = vmatprep.subr.mxu0 0.0
    %698 = vmatpush2.msra.mxu0 0.0
    %699 = vmatprep.subr.mxu0 0.0
    %700 = vmatpush2.msra.mxu0 0.0
    %701 = vmatprep.subr.mxu0 0.0
    %702 = vmatpush2.msra.mxu0 0.0
    %703 = vmatprep.subr.mxu0 0.0
    %704 = vmatpush2.msra.mxu0 0.0
    %705 = vmatprep.mubr.f32.mxu0 0.0
    %706 = vmatmul.mubr.f32.gmra.mxu0 %v639
    %v707 = vpop.f32.mrf.mxu0
    %v708 = vadd.f32 0.0, %v707
    %v709 = vpop.f32.mrf.mxu0
    %710 = vdwg.mxu0
    %711 = vrot.lane.b32.xlu0 %v206, 64
    %v712 = vpop.permute.xlu0 %711
    %v715 = vsel %vm212, %v556, 0
    %717 = vmatprep.subr.mxu0 0.0
    %718 = vmatpush1.msra.mxu0 0.0
    %719 = vmatprep.subr.mxu0 0.0
    %720 = vmatpush1.msra.mxu0 0.0
    %721 = vmatprep.subr.mxu0 0.0
    %722 = vmatpush1.msra.mxu0 0.0
    %723 = vmatprep.subr.mxu0 0.0
    %724 = vmatpush1.msra.mxu0 0.0
    %725 = vmatprep.subr.mxu0 0.0
    %726 = vmatpush1.msra.mxu0 0.0
    %727 = vmatprep.subr.mxu0 0.0
    %728 = vmatpush1.msra.mxu0 0.0
    %729 = vmatprep.subr.mxu0 0.0
    %730 = vmatpush1.msra.mxu0 0.0
    %731 = vmatprep.subr.mxu0 0.0
    %732 = vmatpush1.msra.mxu0 0.0
    %733 = vmatprep.subr.mxu0 0.0
    %734 = vmatpush1.msra.mxu0 0.0
    %735 = vmatprep.subr.mxu0 0.0
    %736 = vmatpush1.msra.mxu0 0.0
    %737 = vmatprep.subr.mxu0 0.0
    %738 = vmatpush1.msra.mxu0 0.0
    %739 = vmatprep.subr.mxu0 0.0
    %740 = vmatpush1.msra.mxu0 0.0
    %741 = vmatprep.subr.mxu0 0.0
    %742 = vmatpush1.msra.mxu0 0.0
    %743 = vmatprep.subr.mxu0 0.0
    %744 = vmatpush1.msra.mxu0 0.0
    %745 = vmatprep.subr.mxu0 0.0
    %746 = vmatpush1.msra.mxu0 0.0
    %747 = vmatprep.subr.mxu0 0.0
    %748 = vmatpush1.msra.mxu0 %v712
    %749 = vmatprep.subr.mxu0 0.0
    %750 = vmatpush2.msra.mxu0 0.0
    %751 = vmatprep.subr.mxu0 0.0
    %752 = vmatpush2.msra.mxu0 0.0
    %753 = vmatprep.subr.mxu0 0.0
    %754 = vmatpush2.msra.mxu0 0.0
    %755 = vmatprep.subr.mxu0 0.0
    %756 = vmatpush2.msra.mxu0 0.0
    %757 = vmatprep.subr.mxu0 0.0
    %758 = vmatpush2.msra.mxu0 0.0
    %759 = vmatprep.subr.mxu0 0.0
    %760 = vmatpush2.msra.mxu0 0.0
    %761 = vmatprep.subr.mxu0 0.0
    %762 = vmatpush2.msra.mxu0 0.0
    %763 = vmatprep.subr.mxu0 0.0
    %764 = vmatpush2.msra.mxu0 0.0
    %765 = vmatprep.subr.mxu0 0.0
    %766 = vmatpush2.msra.mxu0 0.0
    %767 = vmatprep.subr.mxu0 0.0
    %768 = vmatpush2.msra.mxu0 0.0
    %769 = vmatprep.subr.mxu0 0.0
    %770 = vmatpush2.msra.mxu0 0.0
    %771 = vmatprep.subr.mxu0 0.0
    %772 = vmatpush2.msra.mxu0 0.0
    %773 = vmatprep.subr.mxu0 0.0
    %774 = vmatpush2.msra.mxu0 0.0
    %775 = vmatprep.subr.mxu0 0.0
    %776 = vmatpush2.msra.mxu0 0.0
    %777 = vmatprep.subr.mxu0 0.0
    %778 = vmatpush2.msra.mxu0 0.0
    %779 = vmatprep.subr.mxu0 0.0
    %780 = vmatpush2.msra.mxu0 0.0
    %781 = vmatprep.mubr.f32.mxu0 0.0
    %782 = vmatmul.mubr.f32.gmra.mxu0 %v715
    %v783 = vpop.f32.mrf.mxu0
    %v784 = vadd.f32 0.0, %v783
    %v785 = vpop.f32.mrf.mxu0
    %786 = vdwg.mxu0
    %787 = vrot.lane.b32.xlu0 %v208, 64
    %v788 = vpop.permute.xlu0 %787
    %v791 = vsel %vm212, %v558, 0
    %793 = vmatprep.subr.mxu0 0.0
    %794 = vmatpush1.msra.mxu0 0.0
    %795 = vmatprep.subr.mxu0 0.0
    %796 = vmatpush1.msra.mxu0 0.0
    %797 = vmatprep.subr.mxu0 0.0
    %798 = vmatpush1.msra.mxu0 0.0
    %799 = vmatprep.subr.mxu0 0.0
    %800 = vmatpush1.msra.mxu0 0.0
    %801 = vmatprep.subr.mxu0 0.0
    %802 = vmatpush1.msra.mxu0 0.0
    %803 = vmatprep.subr.mxu0 0.0
    %804 = vmatpush1.msra.mxu0 0.0
    %805 = vmatprep.subr.mxu0 0.0
    %806 = vmatpush1.msra.mxu0 0.0
    %807 = vmatprep.subr.mxu0 0.0
    %808 = vmatpush1.msra.mxu0 0.0
    %809 = vmatprep.subr.mxu0 0.0
    %810 = vmatpush1.msra.mxu0 0.0
    %811 = vmatprep.subr.mxu0 0.0
    %812 = vmatpush1.msra.mxu0 0.0
    %813 = vmatprep.subr.mxu0 0.0
    %814 = vmatpush1.msra.mxu0 0.0
    %815 = vmatprep.subr.mxu0 0.0
    %816 = vmatpush1.msra.mxu0 0.0
    %817 = vmatprep.subr.mxu0 0.0
    %818 = vmatpush1.msra.mxu0 0.0
    %819 = vmatprep.subr.mxu0 0.0
    %820 = vmatpush1.msra.mxu0 0.0
    %821 = vmatprep.subr.mxu0 0.0
    %822 = vmatpush1.msra.mxu0 0.0
    %823 = vmatprep.subr.mxu0 0.0
    %824 = vmatpush1.msra.mxu0 %v788
    %825 = vmatprep.subr.mxu0 0.0
    %826 = vmatpush2.msra.mxu0 0.0
    %827 = vmatprep.subr.mxu0 0.0
    %828 = vmatpush2.msra.mxu0 0.0
    %829 = vmatprep.subr.mxu0 0.0
    %830 = vmatpush2.msra.mxu0 0.0
    %831 = vmatprep.subr.mxu0 0.0
    %832 = vmatpush2.msra.mxu0 0.0
    %833 = vmatprep.subr.mxu0 0.0
    %834 = vmatpush2.msra.mxu0 0.0
    %835 = vmatprep.subr.mxu0 0.0
    %836 = vmatpush2.msra.mxu0 0.0
    %837 = vmatprep.subr.mxu0 0.0
    %838 = vmatpush2.msra.mxu0 0.0
    %839 = vmatprep.subr.mxu0 0.0
    %840 = vmatpush2.msra.mxu0 0.0
    %841 = vmatprep.subr.mxu0 0.0
    %842 = vmatpush2.msra.mxu0 0.0
    %843 = vmatprep.subr.mxu0 0.0
    %844 = vmatpush2.msra.mxu0 0.0
    %845 = vmatprep.subr.mxu0 0.0
    %846 = vmatpush2.msra.mxu0 0.0
    %847 = vmatprep.subr.mxu0 0.0
    %848 = vmatpush2.msra.mxu0 0.0
    %849 = vmatprep.subr.mxu0 0.0
    %850 = vmatpush2.msra.mxu0 0.0
    %851 = vmatprep.subr.mxu0 0.0
    %852 = vmatpush2.msra.mxu0 0.0
    %853 = vmatprep.subr.mxu0 0.0
    %854 = vmatpush2.msra.mxu0 0.0
    %855 = vmatprep.subr.mxu0 0.0
    %856 = vmatpush2.msra.mxu0 0.0
    %857 = vmatprep.mubr.f32.mxu0 0.0
    %858 = vmatmul.mubr.f32.gmra.mxu0 %v791
    %v859 = vpop.f32.mrf.mxu0
    %v860 = vadd.f32 0.0, %v859
    %v861 = vpop.f32.mrf.mxu0
    %862 = vdwg.mxu0
    %v864 = vsel %vm212, %v708, 0
    %866 = vmatprep.subr.mxu0 0.0
    %867 = vmatpush1.msra.mxu0 0.0
    %868 = vmatprep.subr.mxu0 0.0
    %869 = vmatpush1.msra.mxu0 0.0
    %870 = vmatprep.subr.mxu0 0.0
    %871 = vmatpush1.msra.mxu0 0.0
    %872 = vmatprep.subr.mxu0 0.0
    %873 = vmatpush1.msra.mxu0 0.0
    %874 = vmatprep.subr.mxu0 0.0
    %875 = vmatpush1.msra.mxu0 0.0
    %876 = vmatprep.subr.mxu0 0.0
    %877 = vmatpush1.msra.mxu0 0.0
    %878 = vmatprep.subr.mxu0 0.0
    %879 = vmatpush1.msra.mxu0 0.0
    %880 = vmatprep.subr.mxu0 0.0
    %881 = vmatpush1.msra.mxu0 0.0
    %882 = vmatprep.subr.mxu0 0.0
    %883 = vmatpush1.msra.mxu0 0.0
    %884 = vmatprep.subr.mxu0 0.0
    %885 = vmatpush1.msra.mxu0 0.0
    %886 = vmatprep.subr.mxu0 0.0
    %887 = vmatpush1.msra.mxu0 0.0
    %888 = vmatprep.subr.mxu0 0.0
    %889 = vmatpush1.msra.mxu0 0.0
    %890 = vmatprep.subr.mxu0 0.0
    %891 = vmatpush1.msra.mxu0 0.0
    %892 = vmatprep.subr.mxu0 0.0
    %893 = vmatpush1.msra.mxu0 0.0
    %894 = vmatprep.subr.mxu0 0.0
    %895 = vmatpush1.msra.mxu0 0.0
    %896 = vmatprep.subr.mxu0 0.0
    %897 = vmatpush1.msra.mxu0 %v199
    %898 = vmatprep.subr.mxu0 0.0
    %899 = vmatpush2.msra.mxu0 0.0
    %900 = vmatprep.subr.mxu0 0.0
    %901 = vmatpush2.msra.mxu0 0.0
    %902 = vmatprep.subr.mxu0 0.0
    %903 = vmatpush2.msra.mxu0 0.0
    %904 = vmatprep.subr.mxu0 0.0
    %905 = vmatpush2.msra.mxu0 0.0
    %906 = vmatprep.subr.mxu0 0.0
    %907 = vmatpush2.msra.mxu0 0.0
    %908 = vmatprep.subr.mxu0 0.0
    %909 = vmatpush2.msra.mxu0 0.0
    %910 = vmatprep.subr.mxu0 0.0
    %911 = vmatpush2.msra.mxu0 0.0
    %912 = vmatprep.subr.mxu0 0.0
    %913 = vmatpush2.msra.mxu0 0.0
    %914 = vmatprep.subr.mxu0 0.0
    %915 = vmatpush2.msra.mxu0 0.0
    %916 = vmatprep.subr.mxu0 0.0
    %917 = vmatpush2.msra.mxu0 0.0
    %918 = vmatprep.subr.mxu0 0.0
    %919 = vmatpush2.msra.mxu0 0.0
    %920 = vmatprep.subr.mxu0 0.0
    %921 = vmatpush2.msra.mxu0 0.0
    %922 = vmatprep.subr.mxu0 0.0
    %923 = vmatpush2.msra.mxu0 0.0
    %924 = vmatprep.subr.mxu0 0.0
    %925 = vmatpush2.msra.mxu0 0.0
    %926 = vmatprep.subr.mxu0 0.0
    %927 = vmatpush2.msra.mxu0 0.0
    %928 = vmatprep.subr.mxu0 0.0
    %929 = vmatpush2.msra.mxu0 0.0
    %930 = vmatprep.mubr.f32.mxu0 0.0
    %931 = vmatmul.mubr.f32.gmra.mxu0 %v864
    %v932 = vpop.f32.mrf.mxu0
    %v933 = vadd.f32 0.0, %v932
    %v934 = vpop.f32.mrf.mxu0
    %935 = vdwg.mxu0
    %v937 = vsel %vm212, %v632, 0
    %939 = vmatprep.subr.mxu0 0.0
    %940 = vmatpush1.msra.mxu0 0.0
    %941 = vmatprep.subr.mxu0 0.0
    %942 = vmatpush1.msra.mxu0 0.0
    %943 = vmatprep.subr.mxu0 0.0
    %944 = vmatpush1.msra.mxu0 0.0
    %945 = vmatprep.subr.mxu0 0.0
    %946 = vmatpush1.msra.mxu0 0.0
    %947 = vmatprep.subr.mxu0 0.0
    %948 = vmatpush1.msra.mxu0 0.0
    %949 = vmatprep.subr.mxu0 0.0
    %950 = vmatpush1.msra.mxu0 0.0
    %951 = vmatprep.subr.mxu0 0.0
    %952 = vmatpush1.msra.mxu0 0.0
    %953 = vmatprep.subr.mxu0 0.0
    %954 = vmatpush1.msra.mxu0 0.0
    %955 = vmatprep.subr.mxu0 0.0
    %956 = vmatpush1.msra.mxu0 0.0
    %957 = vmatprep.subr.mxu0 0.0
    %958 = vmatpush1.msra.mxu0 0.0
    %959 = vmatprep.subr.mxu0 0.0
    %960 = vmatpush1.msra.mxu0 0.0
    %961 = vmatprep.subr.mxu0 0.0
    %962 = vmatpush1.msra.mxu0 0.0
    %963 = vmatprep.subr.mxu0 0.0
    %964 = vmatpush1.msra.mxu0 0.0
    %965 = vmatprep.subr.mxu0 0.0
    %966 = vmatpush1.msra.mxu0 0.0
    %967 = vmatprep.subr.mxu0 0.0
    %968 = vmatpush1.msra.mxu0 0.0
    %969 = vmatprep.subr.mxu0 0.0
    %970 = vmatpush1.msra.mxu0 %v198
    %971 = vmatprep.subr.mxu0 0.0
    %972 = vmatpush2.msra.mxu0 0.0
    %973 = vmatprep.subr.mxu0 0.0
    %974 = vmatpush2.msra.mxu0 0.0
    %975 = vmatprep.subr.mxu0 0.0
    %976 = vmatpush2.msra.mxu0 0.0
    %977 = vmatprep.subr.mxu0 0.0
    %978 = vmatpush2.msra.mxu0 0.0
    %979 = vmatprep.subr.mxu0 0.0
    %980 = vmatpush2.msra.mxu0 0.0
    %981 = vmatprep.subr.mxu0 0.0
    %982 = vmatpush2.msra.mxu0 0.0
    %983 = vmatprep.subr.mxu0 0.0
    %984 = vmatpush2.msra.mxu0 0.0
    %985 = vmatprep.subr.mxu0 0.0
    %986 = vmatpush2.msra.mxu0 0.0
    %987 = vmatprep.subr.mxu0 0.0
    %988 = vmatpush2.msra.mxu0 0.0
    %989 = vmatprep.subr.mxu0 0.0
    %990 = vmatpush2.msra.mxu0 0.0
    %991 = vmatprep.subr.mxu0 0.0
    %992 = vmatpush2.msra.mxu0 0.0
    %993 = vmatprep.subr.mxu0 0.0
    %994 = vmatpush2.msra.mxu0 0.0
    %995 = vmatprep.subr.mxu0 0.0
    %996 = vmatpush2.msra.mxu0 0.0
    %997 = vmatprep.subr.mxu0 0.0
    %998 = vmatpush2.msra.mxu0 0.0
    %999 = vmatprep.subr.mxu0 0.0
    %1000 = vmatpush2.msra.mxu0 0.0
    %1001 = vmatprep.subr.mxu0 0.0
    %1002 = vmatpush2.msra.mxu0 0.0
    %1003 = vmatprep.mubr.f32.mxu0 0.0
    %1004 = vmatmul.mubr.f32.gmra.mxu0 %v937
    %v1005 = vpop.f32.mrf.mxu0
    %v1006 = vadd.f32 %v933, %v1005
    %v1007 = vpop.f32.mrf.mxu0
    %1008 = vdwg.mxu0
    %v1010 = vsel %vm212, %v784, 0
    %1012 = vmatprep.subr.mxu0 0.0
    %1013 = vmatpush1.msra.mxu0 0.0
    %1014 = vmatprep.subr.mxu0 0.0
    %1015 = vmatpush1.msra.mxu0 0.0
    %1016 = vmatprep.subr.mxu0 0.0
    %1017 = vmatpush1.msra.mxu0 0.0
    %1018 = vmatprep.subr.mxu0 0.0
    %1019 = vmatpush1.msra.mxu0 0.0
    %1020 = vmatprep.subr.mxu0 0.0
    %1021 = vmatpush1.msra.mxu0 0.0
    %1022 = vmatprep.subr.mxu0 0.0
    %1023 = vmatpush1.msra.mxu0 0.0
    %1024 = vmatprep.subr.mxu0 0.0
    %1025 = vmatpush1.msra.mxu0 0.0
    %1026 = vmatprep.subr.mxu0 0.0
    %1027 = vmatpush1.msra.mxu0 0.0
    %1028 = vmatprep.subr.mxu0 0.0
    %1029 = vmatpush1.msra.mxu0 0.0
    %1030 = vmatprep.subr.mxu0 0.0
    %1031 = vmatpush1.msra.mxu0 0.0
    %1032 = vmatprep.subr.mxu0 0.0
    %1033 = vmatpush1.msra.mxu0 0.0
    %1034 = vmatprep.subr.mxu0 0.0
    %1035 = vmatpush1.msra.mxu0 0.0
    %1036 = vmatprep.subr.mxu0 0.0
    %1037 = vmatpush1.msra.mxu0 0.0
    %1038 = vmatprep.subr.mxu0 0.0
    %1039 = vmatpush1.msra.mxu0 0.0
    %1040 = vmatprep.subr.mxu0 0.0
    %1041 = vmatpush1.msra.mxu0 0.0
    %1042 = vmatprep.subr.mxu0 0.0
    %1043 = vmatpush1.msra.mxu0 %v200
    %1044 = vmatprep.subr.mxu0 0.0
    %1045 = vmatpush2.msra.mxu0 0.0
    %1046 = vmatprep.subr.mxu0 0.0
    %1047 = vmatpush2.msra.mxu0 0.0
    %1048 = vmatprep.subr.mxu0 0.0
    %1049 = vmatpush2.msra.mxu0 0.0
    %1050 = vmatprep.subr.mxu0 0.0
    %1051 = vmatpush2.msra.mxu0 0.0
    %1052 = vmatprep.subr.mxu0 0.0
    %1053 = vmatpush2.msra.mxu0 0.0
    %1054 = vmatprep.subr.mxu0 0.0
    %1055 = vmatpush2.msra.mxu0 0.0
    %1056 = vmatprep.subr.mxu0 0.0
    %1057 = vmatpush2.msra.mxu0 0.0
    %1058 = vmatprep.subr.mxu0 0.0
    %1059 = vmatpush2.msra.mxu0 0.0
    %1060 = vmatprep.subr.mxu0 0.0
    %1061 = vmatpush2.msra.mxu0 0.0
    %1062 = vmatprep.subr.mxu0 0.0
    %1063 = vmatpush2.msra.mxu0 0.0
    %1064 = vmatprep.subr.mxu0 0.0
    %1065 = vmatpush2.msra.mxu0 0.0
    %1066 = vmatprep.subr.mxu0 0.0
    %1067 = vmatpush2.msra.mxu0 0.0
    %1068 = vmatprep.subr.mxu0 0.0
    %1069 = vmatpush2.msra.mxu0 0.0
    %1070 = vmatprep.subr.mxu0 0.0
    %1071 = vmatpush2.msra.mxu0 0.0
    %1072 = vmatprep.subr.mxu0 0.0
    %1073 = vmatpush2.msra.mxu0 0.0
    %1074 = vmatprep.subr.mxu0 0.0
    %1075 = vmatpush2.msra.mxu0 0.0
    %1076 = vmatprep.mubr.f32.mxu0 0.0
    %1077 = vmatmul.mubr.f32.gmra.mxu0 %v1010
    %v1078 = vpop.f32.mrf.mxu0
    %v1079 = vadd.f32 0.0, %v1078
    %v1080 = vpop.f32.mrf.mxu0
    %1081 = vdwg.mxu0
    %v1082 = vadd.f32 %v1006, %v1079
    %v1084 = vsel %vm212, %v860, 0
    %1086 = vmatprep.subr.mxu0 0.0
    %1087 = vmatpush1.msra.mxu0 0.0
    %1088 = vmatprep.subr.mxu0 0.0
    %1089 = vmatpush1.msra.mxu0 0.0
    %1090 = vmatprep.subr.mxu0 0.0
    %1091 = vmatpush1.msra.mxu0 0.0
    %1092 = vmatprep.subr.mxu0 0.0
    %1093 = vmatpush1.msra.mxu0 0.0
    %1094 = vmatprep.subr.mxu0 0.0
    %1095 = vmatpush1.msra.mxu0 0.0
    %1096 = vmatprep.subr.mxu0 0.0
    %1097 = vmatpush1.msra.mxu0 0.0
    %1098 = vmatprep.subr.mxu0 0.0
    %1099 = vmatpush1.msra.mxu0 0.0
    %1100 = vmatprep.subr.mxu0 0.0
    %1101 = vmatpush1.msra.mxu0 0.0
    %1102 = vmatprep.subr.mxu0 0.0
    %1103 = vmatpush1.msra.mxu0 0.0
    %1104 = vmatprep.subr.mxu0 0.0
    %1105 = vmatpush1.msra.mxu0 0.0
    %1106 = vmatprep.subr.mxu0 0.0
    %1107 = vmatpush1.msra.mxu0 0.0
    %1108 = vmatprep.subr.mxu0 0.0
    %1109 = vmatpush1.msra.mxu0 0.0
    %1110 = vmatprep.subr.mxu0 0.0
    %1111 = vmatpush1.msra.mxu0 0.0
    %1112 = vmatprep.subr.mxu0 0.0
    %1113 = vmatpush1.msra.mxu0 0.0
    %1114 = vmatprep.subr.mxu0 0.0
    %1115 = vmatpush1.msra.mxu0 0.0
    %1116 = vmatprep.subr.mxu0 0.0
    %1117 = vmatpush1.msra.mxu0 %v201
    %1118 = vmatprep.subr.mxu0 0.0
    %1119 = vmatpush2.msra.mxu0 0.0
    %1120 = vmatprep.subr.mxu0 0.0
    %1121 = vmatpush2.msra.mxu0 0.0
    %1122 = vmatprep.subr.mxu0 0.0
    %1123 = vmatpush2.msra.mxu0 0.0
    %1124 = vmatprep.subr.mxu0 0.0
    %1125 = vmatpush2.msra.mxu0 0.0
    %1126 = vmatprep.subr.mxu0 0.0
    %1127 = vmatpush2.msra.mxu0 0.0
    %1128 = vmatprep.subr.mxu0 0.0
    %1129 = vmatpush2.msra.mxu0 0.0
    %1130 = vmatprep.subr.mxu0 0.0
    %1131 = vmatpush2.msra.mxu0 0.0
    %1132 = vmatprep.subr.mxu0 0.0
    %1133 = vmatpush2.msra.mxu0 0.0
    %1134 = vmatprep.subr.mxu0 0.0
    %1135 = vmatpush2.msra.mxu0 0.0
    %1136 = vmatprep.subr.mxu0 0.0
    %1137 = vmatpush2.msra.mxu0 0.0
    %1138 = vmatprep.subr.mxu0 0.0
    %1139 = vmatpush2.msra.mxu0 0.0
    %1140 = vmatprep.subr.mxu0 0.0
    %1141 = vmatpush2.msra.mxu0 0.0
    %1142 = vmatprep.subr.mxu0 0.0
    %1143 = vmatpush2.msra.mxu0 0.0
    %1144 = vmatprep.subr.mxu0 0.0
    %1145 = vmatpush2.msra.mxu0 0.0
    %1146 = vmatprep.subr.mxu0 0.0
    %1147 = vmatpush2.msra.mxu0 0.0
    %1148 = vmatprep.subr.mxu0 0.0
    %1149 = vmatpush2.msra.mxu0 0.0
    %1150 = vmatprep.mubr.f32.mxu0 0.0
    %1151 = vmatmul.mubr.f32.gmra.mxu0 %v1084
    %v1152 = vpop.f32.mrf.mxu0
    %v1153 = vadd.f32 0.0, %v1152
    %v1154 = vpop.f32.mrf.mxu0
    %1155 = vdwg.mxu0
    %v1156 = vadd.f32 %v1082, %v1153
    %1158 = vrot.lane.b32.xlu0 %v195, 120
    %v1159 = vpop.permute.xlu0 %1158
    %1160 = vrot.lane.b32.xlu0 %v195, 112
    %v1161 = vpop.permute.xlu0 %1160
    %1162 = vrot.lane.b32.xlu0 %v195, 104
    %v1163 = vpop.permute.xlu0 %1162
    %s1164 = scalar_lea.vmem [#allocation5], 8
    %v1165 = vld [vmem:[%s1164] sm:$0xff]
    %1166 = vrot.lane.b32.xlu0 %v195, 96
    %v1167 = vpop.permute.xlu0 %1166
    %v1168 = vsel %vm212, %v195, 0
    %v1170 = vsel %vm212, %v1167, 0
    %1172 = vmatprep.subr.mxu0 0.0
    %1173 = vmatpush1.xpose.msra.mxu0 0.0
    %1174 = vmatprep.subr.mxu0 0.0
    %1175 = vmatpush1.xpose.msra.mxu0 0.0
    %1176 = vmatprep.subr.mxu0 0.0
    %1177 = vmatpush1.xpose.msra.mxu0 0.0
    %1178 = vmatprep.subr.mxu0 0.0
    %1179 = vmatpush1.xpose.msra.mxu0 0.0
    %1180 = vmatprep.subr.mxu0 0.0
    %1181 = vmatpush1.xpose.msra.mxu0 0.0
    %1182 = vmatprep.subr.mxu0 0.0
    %1183 = vmatpush1.xpose.msra.mxu0 0.0
    %1184 = vmatprep.subr.mxu0 0.0
    %1185 = vmatpush1.xpose.msra.mxu0 0.0
    %1186 = vmatprep.subr.mxu0 0.0
    %1187 = vmatpush1.xpose.msra.mxu0 0.0
    %1188 = vmatprep.subr.mxu0 0.0
    %1189 = vmatpush1.xpose.msra.mxu0 0.0
    %1190 = vmatprep.subr.mxu0 0.0
    %1191 = vmatpush1.xpose.msra.mxu0 0.0
    %1192 = vmatprep.subr.mxu0 0.0
    %1193 = vmatpush1.xpose.msra.mxu0 0.0
    %1194 = vmatprep.subr.mxu0 0.0
    %1195 = vmatpush1.xpose.msra.mxu0 0.0
    %1196 = vmatprep.subr.mxu0 0.0
    %1197 = vmatpush1.xpose.msra.mxu0 0.0
    %1198 = vmatprep.subr.mxu0 0.0
    %1199 = vmatpush1.xpose.msra.mxu0 0.0
    %1200 = vmatprep.subr.mxu0 0.0
    %1201 = vmatpush1.xpose.msra.mxu0 0.0
    %1202 = vmatprep.subr.mxu0 0.0
    %1203 = vmatpush1.xpose.msra.mxu0 %v1170
    %1204 = vmatprep.subr.mxu0 0.0
    %1205 = vmatpush2.xpose.msra.mxu0 0.0
    %1206 = vmatprep.subr.mxu0 0.0
    %1207 = vmatpush2.xpose.msra.mxu0 0.0
    %1208 = vmatprep.subr.mxu0 0.0
    %1209 = vmatpush2.xpose.msra.mxu0 0.0
    %1210 = vmatprep.subr.mxu0 0.0
    %1211 = vmatpush2.xpose.msra.mxu0 0.0
    %1212 = vmatprep.subr.mxu0 0.0
    %1213 = vmatpush2.xpose.msra.mxu0 0.0
    %1214 = vmatprep.subr.mxu0 0.0
    %1215 = vmatpush2.xpose.msra.mxu0 0.0
    %1216 = vmatprep.subr.mxu0 0.0
    %1217 = vmatpush2.xpose.msra.mxu0 0.0
    %1218 = vmatprep.subr.mxu0 0.0
    %1219 = vmatpush2.xpose.msra.mxu0 0.0
    %1220 = vmatprep.subr.mxu0 0.0
    %1221 = vmatpush2.xpose.msra.mxu0 0.0
    %1222 = vmatprep.subr.mxu0 0.0
    %1223 = vmatpush2.xpose.msra.mxu0 0.0
    %1224 = vmatprep.subr.mxu0 0.0
    %1225 = vmatpush2.xpose.msra.mxu0 0.0
    %1226 = vmatprep.subr.mxu0 0.0
    %1227 = vmatpush2.xpose.msra.mxu0 0.0
    %1228 = vmatprep.subr.mxu0 0.0
    %1229 = vmatpush2.xpose.msra.mxu0 0.0
    %1230 = vmatprep.subr.mxu0 0.0
    %1231 = vmatpush2.xpose.msra.mxu0 0.0
    %1232 = vmatprep.subr.mxu0 0.0
    %1233 = vmatpush2.xpose.msra.mxu0 0.0
    %1234 = vmatprep.subr.mxu0 0.0
    %1235 = vmatpush2.xpose.msra.mxu0 0.0
    %1236 = vmatprep.mubr.f32.mxu0 0.0
    %1237 = vmatmul.mubr.f32.gmra.mxu0 %v1168
    %v1238 = vpop.f32.mrf.mxu0
    %v1239 = vadd.f32 %v1165, %v1238
    %v1240 = vpop.f32.mrf.mxu0
    %1241 = vdwg.mxu0
    %1242 = vrot.lane.b32.xlu0 %v1159, 96
    %v1243 = vpop.permute.xlu0 %1242
    %v1244 = vsel %vm212, %v1159, 0
    %v1246 = vsel %vm212, %v1243, 0
    %1248 = vmatprep.subr.mxu0 0.0
    %1249 = vmatpush1.xpose.msra.mxu0 0.0
    %1250 = vmatprep.subr.mxu0 0.0
    %1251 = vmatpush1.xpose.msra.mxu0 0.0
    %1252 = vmatprep.subr.mxu0 0.0
    %1253 = vmatpush1.xpose.msra.mxu0 0.0
    %1254 = vmatprep.subr.mxu0 0.0
    %1255 = vmatpush1.xpose.msra.mxu0 0.0
    %1256 = vmatprep.subr.mxu0 0.0
    %1257 = vmatpush1.xpose.msra.mxu0 0.0
    %1258 = vmatprep.subr.mxu0 0.0
    %1259 = vmatpush1.xpose.msra.mxu0 0.0
    %1260 = vmatprep.subr.mxu0 0.0
    %1261 = vmatpush1.xpose.msra.mxu0 0.0
    %1262 = vmatprep.subr.mxu0 0.0
    %1263 = vmatpush1.xpose.msra.mxu0 0.0
    %1264 = vmatprep.subr.mxu0 0.0
    %1265 = vmatpush1.xpose.msra.mxu0 0.0
    %1266 = vmatprep.subr.mxu0 0.0
    %1267 = vmatpush1.xpose.msra.mxu0 0.0
    %1268 = vmatprep.subr.mxu0 0.0
    %1269 = vmatpush1.xpose.msra.mxu0 0.0
    %1270 = vmatprep.subr.mxu0 0.0
    %1271 = vmatpush1.xpose.msra.mxu0 0.0
    %1272 = vmatprep.subr.mxu0 0.0
    %1273 = vmatpush1.xpose.msra.mxu0 0.0
    %1274 = vmatprep.subr.mxu0 0.0
    %1275 = vmatpush1.xpose.msra.mxu0 0.0
    %1276 = vmatprep.subr.mxu0 0.0
    %1277 = vmatpush1.xpose.msra.mxu0 0.0
    %1278 = vmatprep.subr.mxu0 0.0
    %1279 = vmatpush1.xpose.msra.mxu0 %v1246
    %1280 = vmatprep.subr.mxu0 0.0
    %1281 = vmatpush2.xpose.msra.mxu0 0.0
    %1282 = vmatprep.subr.mxu0 0.0
    %1283 = vmatpush2.xpose.msra.mxu0 0.0
    %1284 = vmatprep.subr.mxu0 0.0
    %1285 = vmatpush2.xpose.msra.mxu0 0.0
    %1286 = vmatprep.subr.mxu0 0.0
    %1287 = vmatpush2.xpose.msra.mxu0 0.0
    %1288 = vmatprep.subr.mxu0 0.0
    %1289 = vmatpush2.xpose.msra.mxu0 0.0
    %1290 = vmatprep.subr.mxu0 0.0
    %1291 = vmatpush2.xpose.msra.mxu0 0.0
    %1292 = vmatprep.subr.mxu0 0.0
    %1293 = vmatpush2.xpose.msra.mxu0 0.0
    %1294 = vmatprep.subr.mxu0 0.0
    %1295 = vmatpush2.xpose.msra.mxu0 0.0
    %1296 = vmatprep.subr.mxu0 0.0
    %1297 = vmatpush2.xpose.msra.mxu0 0.0
    %1298 = vmatprep.subr.mxu0 0.0
    %1299 = vmatpush2.xpose.msra.mxu0 0.0
    %1300 = vmatprep.subr.mxu0 0.0
    %1301 = vmatpush2.xpose.msra.mxu0 0.0
    %1302 = vmatprep.subr.mxu0 0.0
    %1303 = vmatpush2.xpose.msra.mxu0 0.0
    %1304 = vmatprep.subr.mxu0 0.0
    %1305 = vmatpush2.xpose.msra.mxu0 0.0
    %1306 = vmatprep.subr.mxu0 0.0
    %1307 = vmatpush2.xpose.msra.mxu0 0.0
    %1308 = vmatprep.subr.mxu0 0.0
    %1309 = vmatpush2.xpose.msra.mxu0 0.0
    %1310 = vmatprep.subr.mxu0 0.0
    %1311 = vmatpush2.xpose.msra.mxu0 0.0
    %1312 = vmatprep.mubr.f32.mxu0 0.0
    %1313 = vmatmul.mubr.f32.gmra.mxu0 %v1244
    %v1314 = vpop.f32.mrf.mxu0
    %v1315 = vadd.f32 %v1165, %v1314
    %v1316 = vpop.f32.mrf.mxu0
    %1317 = vdwg.mxu0
    %1318 = vrot.lane.b32.xlu0 %v1161, 96
    %v1319 = vpop.permute.xlu0 %1318
    %v1320 = vsel %vm212, %v1161, 0
    %v1322 = vsel %vm212, %v1319, 0
    %1324 = vmatprep.subr.mxu0 0.0
    %1325 = vmatpush1.xpose.msra.mxu0 0.0
    %1326 = vmatprep.subr.mxu0 0.0
    %1327 = vmatpush1.xpose.msra.mxu0 0.0
    %1328 = vmatprep.subr.mxu0 0.0
    %1329 = vmatpush1.xpose.msra.mxu0 0.0
    %1330 = vmatprep.subr.mxu0 0.0
    %1331 = vmatpush1.xpose.msra.mxu0 0.0
    %1332 = vmatprep.subr.mxu0 0.0
    %1333 = vmatpush1.xpose.msra.mxu0 0.0
    %1334 = vmatprep.subr.mxu0 0.0
    %1335 = vmatpush1.xpose.msra.mxu0 0.0
    %1336 = vmatprep.subr.mxu0 0.0
    %1337 = vmatpush1.xpose.msra.mxu0 0.0
    %1338 = vmatprep.subr.mxu0 0.0
    %1339 = vmatpush1.xpose.msra.mxu0 0.0
    %1340 = vmatprep.subr.mxu0 0.0
    %1341 = vmatpush1.xpose.msra.mxu0 0.0
    %1342 = vmatprep.subr.mxu0 0.0
    %1343 = vmatpush1.xpose.msra.mxu0 0.0
    %1344 = vmatprep.subr.mxu0 0.0
    %1345 = vmatpush1.xpose.msra.mxu0 0.0
    %1346 = vmatprep.subr.mxu0 0.0
    %1347 = vmatpush1.xpose.msra.mxu0 0.0
    %1348 = vmatprep.subr.mxu0 0.0
    %1349 = vmatpush1.xpose.msra.mxu0 0.0
    %1350 = vmatprep.subr.mxu0 0.0
    %1351 = vmatpush1.xpose.msra.mxu0 0.0
    %1352 = vmatprep.subr.mxu0 0.0
    %1353 = vmatpush1.xpose.msra.mxu0 0.0
    %1354 = vmatprep.subr.mxu0 0.0
    %1355 = vmatpush1.xpose.msra.mxu0 %v1322
    %1356 = vmatprep.subr.mxu0 0.0
    %1357 = vmatpush2.xpose.msra.mxu0 0.0
    %1358 = vmatprep.subr.mxu0 0.0
    %1359 = vmatpush2.xpose.msra.mxu0 0.0
    %1360 = vmatprep.subr.mxu0 0.0
    %1361 = vmatpush2.xpose.msra.mxu0 0.0
    %1362 = vmatprep.subr.mxu0 0.0
    %1363 = vmatpush2.xpose.msra.mxu0 0.0
    %1364 = vmatprep.subr.mxu0 0.0
    %1365 = vmatpush2.xpose.msra.mxu0 0.0
    %1366 = vmatprep.subr.mxu0 0.0
    %1367 = vmatpush2.xpose.msra.mxu0 0.0
    %1368 = vmatprep.subr.mxu0 0.0
    %1369 = vmatpush2.xpose.msra.mxu0 0.0
    %1370 = vmatprep.subr.mxu0 0.0
    %1371 = vmatpush2.xpose.msra.mxu0 0.0
    %1372 = vmatprep.subr.mxu0 0.0
    %1373 = vmatpush2.xpose.msra.mxu0 0.0
    %1374 = vmatprep.subr.mxu0 0.0
    %1375 = vmatpush2.xpose.msra.mxu0 0.0
    %1376 = vmatprep.subr.mxu0 0.0
    %1377 = vmatpush2.xpose.msra.mxu0 0.0
    %1378 = vmatprep.subr.mxu0 0.0
    %1379 = vmatpush2.xpose.msra.mxu0 0.0
    %1380 = vmatprep.subr.mxu0 0.0
    %1381 = vmatpush2.xpose.msra.mxu0 0.0
    %1382 = vmatprep.subr.mxu0 0.0
    %1383 = vmatpush2.xpose.msra.mxu0 0.0
    %1384 = vmatprep.subr.mxu0 0.0
    %1385 = vmatpush2.xpose.msra.mxu0 0.0
    %1386 = vmatprep.subr.mxu0 0.0
    %1387 = vmatpush2.xpose.msra.mxu0 0.0
    %1388 = vmatprep.mubr.f32.mxu0 0.0
    %1389 = vmatmul.mubr.f32.gmra.mxu0 %v1320
    %v1390 = vpop.f32.mrf.mxu0
    %v1391 = vadd.f32 %v1165, %v1390
    %v1392 = vpop.f32.mrf.mxu0
    %1393 = vdwg.mxu0
    %1394 = vrot.lane.b32.xlu0 %v1163, 96
    %v1395 = vpop.permute.xlu0 %1394
    %v1396 = vsel %vm212, %v1163, 0
    %v1398 = vsel %vm212, %v1395, 0
    %1400 = vmatprep.subr.mxu0 0.0
    %1401 = vmatpush1.xpose.msra.mxu0 0.0
    %1402 = vmatprep.subr.mxu0 0.0
    %1403 = vmatpush1.xpose.msra.mxu0 0.0
    %1404 = vmatprep.subr.mxu0 0.0
    %1405 = vmatpush1.xpose.msra.mxu0 0.0
    %1406 = vmatprep.subr.mxu0 0.0
    %1407 = vmatpush1.xpose.msra.mxu0 0.0
    %1408 = vmatprep.subr.mxu0 0.0
    %1409 = vmatpush1.xpose.msra.mxu0 0.0
    %1410 = vmatprep.subr.mxu0 0.0
    %1411 = vmatpush1.xpose.msra.mxu0 0.0
    %1412 = vmatprep.subr.mxu0 0.0
    %1413 = vmatpush1.xpose.msra.mxu0 0.0
    %1414 = vmatprep.subr.mxu0 0.0
    %1415 = vmatpush1.xpose.msra.mxu0 0.0
    %1416 = vmatprep.subr.mxu0 0.0
    %1417 = vmatpush1.xpose.msra.mxu0 0.0
    %1418 = vmatprep.subr.mxu0 0.0
    %1419 = vmatpush1.xpose.msra.mxu0 0.0
    %1420 = vmatprep.subr.mxu0 0.0
    %1421 = vmatpush1.xpose.msra.mxu0 0.0
    %1422 = vmatprep.subr.mxu0 0.0
    %1423 = vmatpush1.xpose.msra.mxu0 0.0
    %1424 = vmatprep.subr.mxu0 0.0
    %1425 = vmatpush1.xpose.msra.mxu0 0.0
    %1426 = vmatprep.subr.mxu0 0.0
    %1427 = vmatpush1.xpose.msra.mxu0 0.0
    %1428 = vmatprep.subr.mxu0 0.0
    %1429 = vmatpush1.xpose.msra.mxu0 0.0
    %1430 = vmatprep.subr.mxu0 0.0
    %1431 = vmatpush1.xpose.msra.mxu0 %v1398
    %1432 = vmatprep.subr.mxu0 0.0
    %1433 = vmatpush2.xpose.msra.mxu0 0.0
    %1434 = vmatprep.subr.mxu0 0.0
    %1435 = vmatpush2.xpose.msra.mxu0 0.0
    %1436 = vmatprep.subr.mxu0 0.0
    %1437 = vmatpush2.xpose.msra.mxu0 0.0
    %1438 = vmatprep.subr.mxu0 0.0
    %1439 = vmatpush2.xpose.msra.mxu0 0.0
    %1440 = vmatprep.subr.mxu0 0.0
    %1441 = vmatpush2.xpose.msra.mxu0 0.0
    %1442 = vmatprep.subr.mxu0 0.0
    %1443 = vmatpush2.xpose.msra.mxu0 0.0
    %1444 = vmatprep.subr.mxu0 0.0
    %1445 = vmatpush2.xpose.msra.mxu0 0.0
    %1446 = vmatprep.subr.mxu0 0.0
    %1447 = vmatpush2.xpose.msra.mxu0 0.0
    %1448 = vmatprep.subr.mxu0 0.0
    %1449 = vmatpush2.xpose.msra.mxu0 0.0
    %1450 = vmatprep.subr.mxu0 0.0
    %1451 = vmatpush2.xpose.msra.mxu0 0.0
    %1452 = vmatprep.subr.mxu0 0.0
    %1453 = vmatpush2.xpose.msra.mxu0 0.0
    %1454 = vmatprep.subr.mxu0 0.0
    %1455 = vmatpush2.xpose.msra.mxu0 0.0
    %1456 = vmatprep.subr.mxu0 0.0
    %1457 = vmatpush2.xpose.msra.mxu0 0.0
    %1458 = vmatprep.subr.mxu0 0.0
    %1459 = vmatpush2.xpose.msra.mxu0 0.0
    %1460 = vmatprep.subr.mxu0 0.0
    %1461 = vmatpush2.xpose.msra.mxu0 0.0
    %1462 = vmatprep.subr.mxu0 0.0
    %1463 = vmatpush2.xpose.msra.mxu0 0.0
    %1464 = vmatprep.mubr.f32.mxu0 0.0
    %1465 = vmatmul.mubr.f32.gmra.mxu0 %v1396
    %v1466 = vpop.f32.mrf.mxu0
    %v1467 = vadd.f32 %v1165, %v1466
    %v1468 = vpop.f32.mrf.mxu0
    %1469 = vdwg.mxu0
    %v1470 = vsel %vm212, %v1239, -inf
    %1471 = vmax.xlane.f32.xlu0 %v1470
    %v1472 = vpop.xlane.xlu0 %1471
    %v1473 = vsel %vm212, %v1315, -inf
    %1474 = vmax.xlane.f32.xlu0 %v1473
    %v1475 = vpop.xlane.xlu0 %1474
    %v1476 = vsel %vm212, %v1391, -inf
    %1477 = vmax.xlane.f32.xlu0 %v1476
    %v1478 = vpop.xlane.xlu0 %1477
    %v1479 = vsel %vm212, %v1467, -inf
    %1480 = vmax.xlane.f32.xlu0 %v1479
    %v1481 = vpop.xlane.xlu0 %1480
    %v1482 = vsub.f32 %v1239, %v1472
    %v1483 = vsub.f32 %v1315, %v1475
    %v1484 = vsub.f32 %v1391, %v1478
    %v1485 = vsub.f32 %v1467, %v1481
    %v1486 = vmul.f32 %v1482, 1.442695
    %v1487 = vpow.pop %v1486
    %v1488 = vmul.f32 %v1483, 1.442695
    %v1489 = vpow.pop %v1488
    %v1490 = vmul.f32 %v1484, 1.442695
    %v1491 = vpow.pop %v1490
    %v1492 = vmul.f32 %v1485, 1.442695
    %v1493 = vpow.pop %v1492
    %v1494 = vsel %vm212, %v1487, 0.0
    %1495 = vadd.xlane.f32.xlu0 %v1494
    %v1496 = vpop.xlane.xlu0 %1495
    %v1497 = vsel %vm212, %v1489, 0.0
    %1498 = vadd.xlane.f32.xlu0 %v1497
    %v1499 = vpop.xlane.xlu0 %1498
    %v1500 = vsel %vm212, %v1491, 0.0
    %1501 = vadd.xlane.f32.xlu0 %v1500
    %v1502 = vpop.xlane.xlu0 %1501
    %v1503 = vsel %vm212, %v1493, 0.0
    %1504 = vadd.xlane.f32.xlu0 %v1503
    %v1505 = vpop.xlane.xlu0 %1504
    %v1506 = vrcp.pop %v1496
    %v1507 = vmul.f32 %v1487, %v1506
    %v1508 = vrcp.pop %v1499
    %v1509 = vmul.f32 %v1489, %v1508
    %v1510 = vrcp.pop %v1502
    %v1511 = vmul.f32 %v1491, %v1510
    %v1512 = vrcp.pop %v1505
    %v1513 = vmul.f32 %v1493, %v1512
    %1514 = vrot.lane.b32.xlu0 %v195, 64
    %v1515 = vpop.permute.xlu0 %1514
    %v1518 = vsel %vm212, %v1507, 0
    %1520 = vmatprep.subr.mxu0 0.0
    %1521 = vmatpush1.msra.mxu0 0.0
    %1522 = vmatprep.subr.mxu0 0.0
    %1523 = vmatpush1.msra.mxu0 0.0
    %1524 = vmatprep.subr.mxu0 0.0
    %1525 = vmatpush1.msra.mxu0 0.0
    %1526 = vmatprep.subr.mxu0 0.0
    %1527 = vmatpush1.msra.mxu0 0.0
    %1528 = vmatprep.subr.mxu0 0.0
    %1529 = vmatpush1.msra.mxu0 0.0
    %1530 = vmatprep.subr.mxu0 0.0
    %1531 = vmatpush1.msra.mxu0 0.0
    %1532 = vmatprep.subr.mxu0 0.0
    %1533 = vmatpush1.msra.mxu0 0.0
    %1534 = vmatprep.subr.mxu0 0.0
    %1535 = vmatpush1.msra.mxu0 0.0
    %1536 = vmatprep.subr.mxu0 0.0
    %1537 = vmatpush1.msra.mxu0 0.0
    %1538 = vmatprep.subr.mxu0 0.0
    %1539 = vmatpush1.msra.mxu0 0.0
    %1540 = vmatprep.subr.mxu0 0.0
    %1541 = vmatpush1.msra.mxu0 0.0
    %1542 = vmatprep.subr.mxu0 0.0
    %1543 = vmatpush1.msra.mxu0 0.0
    %1544 = vmatprep.subr.mxu0 0.0
    %1545 = vmatpush1.msra.mxu0 0.0
    %1546 = vmatprep.subr.mxu0 0.0
    %1547 = vmatpush1.msra.mxu0 0.0
    %1548 = vmatprep.subr.mxu0 0.0
    %1549 = vmatpush1.msra.mxu0 0.0
    %1550 = vmatprep.subr.mxu0 0.0
    %1551 = vmatpush1.msra.mxu0 %v1515
    %1552 = vmatprep.subr.mxu0 0.0
    %1553 = vmatpush2.msra.mxu0 0.0
    %1554 = vmatprep.subr.mxu0 0.0
    %1555 = vmatpush2.msra.mxu0 0.0
    %1556 = vmatprep.subr.mxu0 0.0
    %1557 = vmatpush2.msra.mxu0 0.0
    %1558 = vmatprep.subr.mxu0 0.0
    %1559 = vmatpush2.msra.mxu0 0.0
    %1560 = vmatprep.subr.mxu0 0.0
    %1561 = vmatpush2.msra.mxu0 0.0
    %1562 = vmatprep.subr.mxu0 0.0
    %1563 = vmatpush2.msra.mxu0 0.0
    %1564 = vmatprep.subr.mxu0 0.0
    %1565 = vmatpush2.msra.mxu0 0.0
    %1566 = vmatprep.subr.mxu0 0.0
    %1567 = vmatpush2.msra.mxu0 0.0
    %1568 = vmatprep.subr.mxu0 0.0
    %1569 = vmatpush2.msra.mxu0 0.0
    %1570 = vmatprep.subr.mxu0 0.0
    %1571 = vmatpush2.msra.mxu0 0.0
    %1572 = vmatprep.subr.mxu0 0.0
    %1573 = vmatpush2.msra.mxu0 0.0
    %1574 = vmatprep.subr.mxu0 0.0
    %1575 = vmatpush2.msra.mxu0 0.0
    %1576 = vmatprep.subr.mxu0 0.0
    %1577 = vmatpush2.msra.mxu0 0.0
    %1578 = vmatprep.subr.mxu0 0.0
    %1579 = vmatpush2.msra.mxu0 0.0
    %1580 = vmatprep.subr.mxu0 0.0
    %1581 = vmatpush2.msra.mxu0 0.0
    %1582 = vmatprep.subr.mxu0 0.0
    %1583 = vmatpush2.msra.mxu0 0.0
    %1584 = vmatprep.mubr.f32.mxu0 0.0
    %1585 = vmatmul.mubr.f32.gmra.mxu0 %v1518
    %v1586 = vpop.f32.mrf.mxu0
    %v1587 = vadd.f32 0.0, %v1586
    %v1588 = vpop.f32.mrf.mxu0
    %1589 = vdwg.mxu0
    %1590 = vrot.lane.b32.xlu0 %v1159, 64
    %v1591 = vpop.permute.xlu0 %1590
    %v1594 = vsel %vm212, %v1509, 0
    %1596 = vmatprep.subr.mxu0 0.0
    %1597 = vmatpush1.msra.mxu0 0.0
    %1598 = vmatprep.subr.mxu0 0.0
    %1599 = vmatpush1.msra.mxu0 0.0
    %1600 = vmatprep.subr.mxu0 0.0
    %1601 = vmatpush1.msra.mxu0 0.0
    %1602 = vmatprep.subr.mxu0 0.0
    %1603 = vmatpush1.msra.mxu0 0.0
    %1604 = vmatprep.subr.mxu0 0.0
    %1605 = vmatpush1.msra.mxu0 0.0
    %1606 = vmatprep.subr.mxu0 0.0
    %1607 = vmatpush1.msra.mxu0 0.0
    %1608 = vmatprep.subr.mxu0 0.0
    %1609 = vmatpush1.msra.mxu0 0.0
    %1610 = vmatprep.subr.mxu0 0.0
    %1611 = vmatpush1.msra.mxu0 0.0
    %1612 = vmatprep.subr.mxu0 0.0
    %1613 = vmatpush1.msra.mxu0 0.0
    %1614 = vmatprep.subr.mxu0 0.0
    %1615 = vmatpush1.msra.mxu0 0.0
    %1616 = vmatprep.subr.mxu0 0.0
    %1617 = vmatpush1.msra.mxu0 0.0
    %1618 = vmatprep.subr.mxu0 0.0
    %1619 = vmatpush1.msra.mxu0 0.0
    %1620 = vmatprep.subr.mxu0 0.0
    %1621 = vmatpush1.msra.mxu0 0.0
    %1622 = vmatprep.subr.mxu0 0.0
    %1623 = vmatpush1.msra.mxu0 0.0
    %1624 = vmatprep.subr.mxu0 0.0
    %1625 = vmatpush1.msra.mxu0 0.0
    %1626 = vmatprep.subr.mxu0 0.0
    %1627 = vmatpush1.msra.mxu0 %v1591
    %1628 = vmatprep.subr.mxu0 0.0
    %1629 = vmatpush2.msra.mxu0 0.0
    %1630 = vmatprep.subr.mxu0 0.0
    %1631 = vmatpush2.msra.mxu0 0.0
    %1632 = vmatprep.subr.mxu0 0.0
    %1633 = vmatpush2.msra.mxu0 0.0
    %1634 = vmatprep.subr.mxu0 0.0
    %1635 = vmatpush2.msra.mxu0 0.0
    %1636 = vmatprep.subr.mxu0 0.0
    %1637 = vmatpush2.msra.mxu0 0.0
    %1638 = vmatprep.subr.mxu0 0.0
    %1639 = vmatpush2.msra.mxu0 0.0
    %1640 = vmatprep.subr.mxu0 0.0
    %1641 = vmatpush2.msra.mxu0 0.0
    %1642 = vmatprep.subr.mxu0 0.0
    %1643 = vmatpush2.msra.mxu0 0.0
    %1644 = vmatprep.subr.mxu0 0.0
    %1645 = vmatpush2.msra.mxu0 0.0
    %1646 = vmatprep.subr.mxu0 0.0
    %1647 = vmatpush2.msra.mxu0 0.0
    %1648 = vmatprep.subr.mxu0 0.0
    %1649 = vmatpush2.msra.mxu0 0.0
    %1650 = vmatprep.subr.mxu0 0.0
    %1651 = vmatpush2.msra.mxu0 0.0
    %1652 = vmatprep.subr.mxu0 0.0
    %1653 = vmatpush2.msra.mxu0 0.0
    %1654 = vmatprep.subr.mxu0 0.0
    %1655 = vmatpush2.msra.mxu0 0.0
    %1656 = vmatprep.subr.mxu0 0.0
    %1657 = vmatpush2.msra.mxu0 0.0
    %1658 = vmatprep.subr.mxu0 0.0
    %1659 = vmatpush2.msra.mxu0 0.0
    %1660 = vmatprep.mubr.f32.mxu0 0.0
    %1661 = vmatmul.mubr.f32.gmra.mxu0 %v1594
    %v1662 = vpop.f32.mrf.mxu0
    %v1663 = vadd.f32 0.0, %v1662
    %v1664 = vpop.f32.mrf.mxu0
    %1665 = vdwg.mxu0
    %1666 = vrot.lane.b32.xlu0 %v1161, 64
    %v1667 = vpop.permute.xlu0 %1666
    %v1670 = vsel %vm212, %v1511, 0
    %1672 = vmatprep.subr.mxu0 0.0
    %1673 = vmatpush1.msra.mxu0 0.0
    %1674 = vmatprep.subr.mxu0 0.0
    %1675 = vmatpush1.msra.mxu0 0.0
    %1676 = vmatprep.subr.mxu0 0.0
    %1677 = vmatpush1.msra.mxu0 0.0
    %1678 = vmatprep.subr.mxu0 0.0
    %1679 = vmatpush1.msra.mxu0 0.0
    %1680 = vmatprep.subr.mxu0 0.0
    %1681 = vmatpush1.msra.mxu0 0.0
    %1682 = vmatprep.subr.mxu0 0.0
    %1683 = vmatpush1.msra.mxu0 0.0
    %1684 = vmatprep.subr.mxu0 0.0
    %1685 = vmatpush1.msra.mxu0 0.0
    %1686 = vmatprep.subr.mxu0 0.0
    %1687 = vmatpush1.msra.mxu0 0.0
    %1688 = vmatprep.subr.mxu0 0.0
    %1689 = vmatpush1.msra.mxu0 0.0
    %1690 = vmatprep.subr.mxu0 0.0
    %1691 = vmatpush1.msra.mxu0 0.0
    %1692 = vmatprep.subr.mxu0 0.0
    %1693 = vmatpush1.msra.mxu0 0.0
    %1694 = vmatprep.subr.mxu0 0.0
    %1695 = vmatpush1.msra.mxu0 0.0
    %1696 = vmatprep.subr.mxu0 0.0
    %1697 = vmatpush1.msra.mxu0 0.0
    %1698 = vmatprep.subr.mxu0 0.0
    %1699 = vmatpush1.msra.mxu0 0.0
    %1700 = vmatprep.subr.mxu0 0.0
    %1701 = vmatpush1.msra.mxu0 0.0
    %1702 = vmatprep.subr.mxu0 0.0
    %1703 = vmatpush1.msra.mxu0 %v1667
    %1704 = vmatprep.subr.mxu0 0.0
    %1705 = vmatpush2.msra.mxu0 0.0
    %1706 = vmatprep.subr.mxu0 0.0
    %1707 = vmatpush2.msra.mxu0 0.0
    %1708 = vmatprep.subr.mxu0 0.0
    %1709 = vmatpush2.msra.mxu0 0.0
    %1710 = vmatprep.subr.mxu0 0.0
    %1711 = vmatpush2.msra.mxu0 0.0
    %1712 = vmatprep.subr.mxu0 0.0
    %1713 = vmatpush2.msra.mxu0 0.0
    %1714 = vmatprep.subr.mxu0 0.0
    %1715 = vmatpush2.msra.mxu0 0.0
    %1716 = vmatprep.subr.mxu0 0.0
    %1717 = vmatpush2.msra.mxu0 0.0
    %1718 = vmatprep.subr.mxu0 0.0
    %1719 = vmatpush2.msra.mxu0 0.0
    %1720 = vmatprep.subr.mxu0 0.0
    %1721 = vmatpush2.msra.mxu0 0.0
    %1722 = vmatprep.subr.mxu0 0.0
    %1723 = vmatpush2.msra.mxu0 0.0
    %1724 = vmatprep.subr.mxu0 0.0
    %1725 = vmatpush2.msra.mxu0 0.0
    %1726 = vmatprep.subr.mxu0 0.0
    %1727 = vmatpush2.msra.mxu0 0.0
    %1728 = vmatprep.subr.mxu0 0.0
    %1729 = vmatpush2.msra.mxu0 0.0
    %1730 = vmatprep.subr.mxu0 0.0
    %1731 = vmatpush2.msra.mxu0 0.0
    %1732 = vmatprep.subr.mxu0 0.0
    %1733 = vmatpush2.msra.mxu0 0.0
    %1734 = vmatprep.subr.mxu0 0.0
    %1735 = vmatpush2.msra.mxu0 0.0
    %1736 = vmatprep.mubr.f32.mxu0 0.0
    %1737 = vmatmul.mubr.f32.gmra.mxu0 %v1670
    %v1738 = vpop.f32.mrf.mxu0
    %v1739 = vadd.f32 0.0, %v1738
    %v1740 = vpop.f32.mrf.mxu0
    %1741 = vdwg.mxu0
    %1742 = vrot.lane.b32.xlu0 %v1163, 64
    %v1743 = vpop.permute.xlu0 %1742
    %v1746 = vsel %vm212, %v1513, 0
    %1748 = vmatprep.subr.mxu0 0.0
    %1749 = vmatpush1.msra.mxu0 0.0
    %1750 = vmatprep.subr.mxu0 0.0
    %1751 = vmatpush1.msra.mxu0 0.0
    %1752 = vmatprep.subr.mxu0 0.0
    %1753 = vmatpush1.msra.mxu0 0.0
    %1754 = vmatprep.subr.mxu0 0.0
    %1755 = vmatpush1.msra.mxu0 0.0
    %1756 = vmatprep.subr.mxu0 0.0
    %1757 = vmatpush1.msra.mxu0 0.0
    %1758 = vmatprep.subr.mxu0 0.0
    %1759 = vmatpush1.msra.mxu0 0.0
    %1760 = vmatprep.subr.mxu0 0.0
    %1761 = vmatpush1.msra.mxu0 0.0
    %1762 = vmatprep.subr.mxu0 0.0
    %1763 = vmatpush1.msra.mxu0 0.0
    %1764 = vmatprep.subr.mxu0 0.0
    %1765 = vmatpush1.msra.mxu0 0.0
    %1766 = vmatprep.subr.mxu0 0.0
    %1767 = vmatpush1.msra.mxu0 0.0
    %1768 = vmatprep.subr.mxu0 0.0
    %1769 = vmatpush1.msra.mxu0 0.0
    %1770 = vmatprep.subr.mxu0 0.0
    %1771 = vmatpush1.msra.mxu0 0.0
    %1772 = vmatprep.subr.mxu0 0.0
    %1773 = vmatpush1.msra.mxu0 0.0
    %1774 = vmatprep.subr.mxu0 0.0
    %1775 = vmatpush1.msra.mxu0 0.0
    %1776 = vmatprep.subr.mxu0 0.0
    %1777 = vmatpush1.msra.mxu0 0.0
    %1778 = vmatprep.subr.mxu0 0.0
    %1779 = vmatpush1.msra.mxu0 %v1743
    %1780 = vmatprep.subr.mxu0 0.0
    %1781 = vmatpush2.msra.mxu0 0.0
    %1782 = vmatprep.subr.mxu0 0.0
    %1783 = vmatpush2.msra.mxu0 0.0
    %1784 = vmatprep.subr.mxu0 0.0
    %1785 = vmatpush2.msra.mxu0 0.0
    %1786 = vmatprep.subr.mxu0 0.0
    %1787 = vmatpush2.msra.mxu0 0.0
    %1788 = vmatprep.subr.mxu0 0.0
    %1789 = vmatpush2.msra.mxu0 0.0
    %1790 = vmatprep.subr.mxu0 0.0
    %1791 = vmatpush2.msra.mxu0 0.0
    %1792 = vmatprep.subr.mxu0 0.0
    %1793 = vmatpush2.msra.mxu0 0.0
    %1794 = vmatprep.subr.mxu0 0.0
    %1795 = vmatpush2.msra.mxu0 0.0
    %1796 = vmatprep.subr.mxu0 0.0
    %1797 = vmatpush2.msra.mxu0 0.0
    %1798 = vmatprep.subr.mxu0 0.0
    %1799 = vmatpush2.msra.mxu0 0.0
    %1800 = vmatprep.subr.mxu0 0.0
    %1801 = vmatpush2.msra.mxu0 0.0
    %1802 = vmatprep.subr.mxu0 0.0
    %1803 = vmatpush2.msra.mxu0 0.0
    %1804 = vmatprep.subr.mxu0 0.0
    %1805 = vmatpush2.msra.mxu0 0.0
    %1806 = vmatprep.subr.mxu0 0.0
    %1807 = vmatpush2.msra.mxu0 0.0
    %1808 = vmatprep.subr.mxu0 0.0
    %1809 = vmatpush2.msra.mxu0 0.0
    %1810 = vmatprep.subr.mxu0 0.0
    %1811 = vmatpush2.msra.mxu0 0.0
    %1812 = vmatprep.mubr.f32.mxu0 0.0
    %1813 = vmatmul.mubr.f32.gmra.mxu0 %v1746
    %v1814 = vpop.f32.mrf.mxu0
    %v1815 = vadd.f32 0.0, %v1814
    %v1816 = vpop.f32.mrf.mxu0
    %1817 = vdwg.mxu0
    %v1819 = vsel %vm212, %v1663, 0
    %1821 = vmatprep.subr.mxu0 0.0
    %1822 = vmatpush1.msra.mxu0 0.0
    %1823 = vmatprep.subr.mxu0 0.0
    %1824 = vmatpush1.msra.mxu0 0.0
    %1825 = vmatprep.subr.mxu0 0.0
    %1826 = vmatpush1.msra.mxu0 0.0
    %1827 = vmatprep.subr.mxu0 0.0
    %1828 = vmatpush1.msra.mxu0 0.0
    %1829 = vmatprep.subr.mxu0 0.0
    %1830 = vmatpush1.msra.mxu0 0.0
    %1831 = vmatprep.subr.mxu0 0.0
    %1832 = vmatpush1.msra.mxu0 0.0
    %1833 = vmatprep.subr.mxu0 0.0
    %1834 = vmatpush1.msra.mxu0 0.0
    %1835 = vmatprep.subr.mxu0 0.0
    %1836 = vmatpush1.msra.mxu0 0.0
    %1837 = vmatprep.subr.mxu0 0.0
    %1838 = vmatpush1.msra.mxu0 0.0
    %1839 = vmatprep.subr.mxu0 0.0
    %1840 = vmatpush1.msra.mxu0 0.0
    %1841 = vmatprep.subr.mxu0 0.0
    %1842 = vmatpush1.msra.mxu0 0.0
    %1843 = vmatprep.subr.mxu0 0.0
    %1844 = vmatpush1.msra.mxu0 0.0
    %1845 = vmatprep.subr.mxu0 0.0
    %1846 = vmatpush1.msra.mxu0 0.0
    %1847 = vmatprep.subr.mxu0 0.0
    %1848 = vmatpush1.msra.mxu0 0.0
    %1849 = vmatprep.subr.mxu0 0.0
    %1850 = vmatpush1.msra.mxu0 0.0
    %1851 = vmatprep.subr.mxu0 0.0
    %1852 = vmatpush1.msra.mxu0 %v199
    %1853 = vmatprep.subr.mxu0 0.0
    %1854 = vmatpush2.msra.mxu0 0.0
    %1855 = vmatprep.subr.mxu0 0.0
    %1856 = vmatpush2.msra.mxu0 0.0
    %1857 = vmatprep.subr.mxu0 0.0
    %1858 = vmatpush2.msra.mxu0 0.0
    %1859 = vmatprep.subr.mxu0 0.0
    %1860 = vmatpush2.msra.mxu0 0.0
    %1861 = vmatprep.subr.mxu0 0.0
    %1862 = vmatpush2.msra.mxu0 0.0
    %1863 = vmatprep.subr.mxu0 0.0
    %1864 = vmatpush2.msra.mxu0 0.0
    %1865 = vmatprep.subr.mxu0 0.0
    %1866 = vmatpush2.msra.mxu0 0.0
    %1867 = vmatprep.subr.mxu0 0.0
    %1868 = vmatpush2.msra.mxu0 0.0
    %1869 = vmatprep.subr.mxu0 0.0
    %1870 = vmatpush2.msra.mxu0 0.0
    %1871 = vmatprep.subr.mxu0 0.0
    %1872 = vmatpush2.msra.mxu0 0.0
    %1873 = vmatprep.subr.mxu0 0.0
    %1874 = vmatpush2.msra.mxu0 0.0
    %1875 = vmatprep.subr.mxu0 0.0
    %1876 = vmatpush2.msra.mxu0 0.0
    %1877 = vmatprep.subr.mxu0 0.0
    %1878 = vmatpush2.msra.mxu0 0.0
    %1879 = vmatprep.subr.mxu0 0.0
    %1880 = vmatpush2.msra.mxu0 0.0
    %1881 = vmatprep.subr.mxu0 0.0
    %1882 = vmatpush2.msra.mxu0 0.0
    %1883 = vmatprep.subr.mxu0 0.0
    %1884 = vmatpush2.msra.mxu0 0.0
    %1885 = vmatprep.mubr.f32.mxu0 0.0
    %1886 = vmatmul.mubr.f32.gmra.mxu0 %v1819
    %v1887 = vpop.f32.mrf.mxu0
    %v1888 = vadd.f32 0.0, %v1887
    %v1889 = vpop.f32.mrf.mxu0
    %1890 = vdwg.mxu0
    %v1892 = vsel %vm212, %v1587, 0
    %1894 = vmatprep.subr.mxu0 0.0
    %1895 = vmatpush1.msra.mxu0 0.0
    %1896 = vmatprep.subr.mxu0 0.0
    %1897 = vmatpush1.msra.mxu0 0.0
    %1898 = vmatprep.subr.mxu0 0.0
    %1899 = vmatpush1.msra.mxu0 0.0
    %1900 = vmatprep.subr.mxu0 0.0
    %1901 = vmatpush1.msra.mxu0 0.0
    %1902 = vmatprep.subr.mxu0 0.0
    %1903 = vmatpush1.msra.mxu0 0.0
    %1904 = vmatprep.subr.mxu0 0.0
    %1905 = vmatpush1.msra.mxu0 0.0
    %1906 = vmatprep.subr.mxu0 0.0
    %1907 = vmatpush1.msra.mxu0 0.0
    %1908 = vmatprep.subr.mxu0 0.0
    %1909 = vmatpush1.msra.mxu0 0.0
    %1910 = vmatprep.subr.mxu0 0.0
    %1911 = vmatpush1.msra.mxu0 0.0
    %1912 = vmatprep.subr.mxu0 0.0
    %1913 = vmatpush1.msra.mxu0 0.0
    %1914 = vmatprep.subr.mxu0 0.0
    %1915 = vmatpush1.msra.mxu0 0.0
    %1916 = vmatprep.subr.mxu0 0.0
    %1917 = vmatpush1.msra.mxu0 0.0
    %1918 = vmatprep.subr.mxu0 0.0
    %1919 = vmatpush1.msra.mxu0 0.0
    %1920 = vmatprep.subr.mxu0 0.0
    %1921 = vmatpush1.msra.mxu0 0.0
    %1922 = vmatprep.subr.mxu0 0.0
    %1923 = vmatpush1.msra.mxu0 0.0
    %1924 = vmatprep.subr.mxu0 0.0
    %1925 = vmatpush1.msra.mxu0 %v198
    %1926 = vmatprep.subr.mxu0 0.0
    %1927 = vmatpush2.msra.mxu0 0.0
    %1928 = vmatprep.subr.mxu0 0.0
    %1929 = vmatpush2.msra.mxu0 0.0
    %1930 = vmatprep.subr.mxu0 0.0
    %1931 = vmatpush2.msra.mxu0 0.0
    %1932 = vmatprep.subr.mxu0 0.0
    %1933 = vmatpush2.msra.mxu0 0.0
    %1934 = vmatprep.subr.mxu0 0.0
    %1935 = vmatpush2.msra.mxu0 0.0
    %1936 = vmatprep.subr.mxu0 0.0
    %1937 = vmatpush2.msra.mxu0 0.0
    %1938 = vmatprep.subr.mxu0 0.0
    %1939 = vmatpush2.msra.mxu0 0.0
    %1940 = vmatprep.subr.mxu0 0.0
    %1941 = vmatpush2.msra.mxu0 0.0
    %1942 = vmatprep.subr.mxu0 0.0
    %1943 = vmatpush2.msra.mxu0 0.0
    %1944 = vmatprep.subr.mxu0 0.0
    %1945 = vmatpush2.msra.mxu0 0.0
    %1946 = vmatprep.subr.mxu0 0.0
    %1947 = vmatpush2.msra.mxu0 0.0
    %1948 = vmatprep.subr.mxu0 0.0
    %1949 = vmatpush2.msra.mxu0 0.0
    %1950 = vmatprep.subr.mxu0 0.0
    %1951 = vmatpush2.msra.mxu0 0.0
    %1952 = vmatprep.subr.mxu0 0.0
    %1953 = vmatpush2.msra.mxu0 0.0
    %1954 = vmatprep.subr.mxu0 0.0
    %1955 = vmatpush2.msra.mxu0 0.0
    %1956 = vmatprep.subr.mxu0 0.0
    %1957 = vmatpush2.msra.mxu0 0.0
    %1958 = vmatprep.mubr.f32.mxu0 0.0
    %1959 = vmatmul.mubr.f32.gmra.mxu0 %v1892
    %v1960 = vpop.f32.mrf.mxu0
    %v1961 = vadd.f32 %v1888, %v1960
    %v1962 = vpop.f32.mrf.mxu0
    %1963 = vdwg.mxu0
    %v1965 = vsel %vm212, %v1739, 0
    %1967 = vmatprep.subr.mxu0 0.0
    %1968 = vmatpush1.msra.mxu0 0.0
    %1969 = vmatprep.subr.mxu0 0.0
    %1970 = vmatpush1.msra.mxu0 0.0
    %1971 = vmatprep.subr.mxu0 0.0
    %1972 = vmatpush1.msra.mxu0 0.0
    %1973 = vmatprep.subr.mxu0 0.0
    %1974 = vmatpush1.msra.mxu0 0.0
    %1975 = vmatprep.subr.mxu0 0.0
    %1976 = vmatpush1.msra.mxu0 0.0
    %1977 = vmatprep.subr.mxu0 0.0
    %1978 = vmatpush1.msra.mxu0 0.0
    %1979 = vmatprep.subr.mxu0 0.0
    %1980 = vmatpush1.msra.mxu0 0.0
    %1981 = vmatprep.subr.mxu0 0.0
    %1982 = vmatpush1.msra.mxu0 0.0
    %1983 = vmatprep.subr.mxu0 0.0
    %1984 = vmatpush1.msra.mxu0 0.0
    %1985 = vmatprep.subr.mxu0 0.0
    %1986 = vmatpush1.msra.mxu0 0.0
    %1987 = vmatprep.subr.mxu0 0.0
    %1988 = vmatpush1.msra.mxu0 0.0
    %1989 = vmatprep.subr.mxu0 0.0
    %1990 = vmatpush1.msra.mxu0 0.0
    %1991 = vmatprep.subr.mxu0 0.0
    %1992 = vmatpush1.msra.mxu0 0.0
    %1993 = vmatprep.subr.mxu0 0.0
    %1994 = vmatpush1.msra.mxu0 0.0
    %1995 = vmatprep.subr.mxu0 0.0
    %1996 = vmatpush1.msra.mxu0 0.0
    %1997 = vmatprep.subr.mxu0 0.0
    %1998 = vmatpush1.msra.mxu0 %v200
    %1999 = vmatprep.subr.mxu0 0.0
    %2000 = vmatpush2.msra.mxu0 0.0
    %2001 = vmatprep.subr.mxu0 0.0
    %2002 = vmatpush2.msra.mxu0 0.0
    %2003 = vmatprep.subr.mxu0 0.0
    %2004 = vmatpush2.msra.mxu0 0.0
    %2005 = vmatprep.subr.mxu0 0.0
    %2006 = vmatpush2.msra.mxu0 0.0
    %2007 = vmatprep.subr.mxu0 0.0
    %2008 = vmatpush2.msra.mxu0 0.0
    %2009 = vmatprep.subr.mxu0 0.0
    %2010 = vmatpush2.msra.mxu0 0.0
    %2011 = vmatprep.subr.mxu0 0.0
    %2012 = vmatpush2.msra.mxu0 0.0
    %2013 = vmatprep.subr.mxu0 0.0
    %2014 = vmatpush2.msra.mxu0 0.0
    %2015 = vmatprep.subr.mxu0 0.0
    %2016 = vmatpush2.msra.mxu0 0.0
    %2017 = vmatprep.subr.mxu0 0.0
    %2018 = vmatpush2.msra.mxu0 0.0
    %2019 = vmatprep.subr.mxu0 0.0
    %2020 = vmatpush2.msra.mxu0 0.0
    %2021 = vmatprep.subr.mxu0 0.0
    %2022 = vmatpush2.msra.mxu0 0.0
    %2023 = vmatprep.subr.mxu0 0.0
    %2024 = vmatpush2.msra.mxu0 0.0
    %2025 = vmatprep.subr.mxu0 0.0
    %2026 = vmatpush2.msra.mxu0 0.0
    %2027 = vmatprep.subr.mxu0 0.0
    %2028 = vmatpush2.msra.mxu0 0.0
    %2029 = vmatprep.subr.mxu0 0.0
    %2030 = vmatpush2.msra.mxu0 0.0
    %2031 = vmatprep.mubr.f32.mxu0 0.0
    %2032 = vmatmul.mubr.f32.gmra.mxu0 %v1965
    %v2033 = vpop.f32.mrf.mxu0
    %v2034 = vadd.f32 0.0, %v2033
    %v2035 = vpop.f32.mrf.mxu0
    %2036 = vdwg.mxu0
    %v2037 = vadd.f32 %v1961, %v2034
    %v2039 = vsel %vm212, %v1815, 0
    %2041 = vmatprep.subr.mxu0 0.0
    %2042 = vmatpush1.msra.mxu0 0.0
    %2043 = vmatprep.subr.mxu0 0.0
    %2044 = vmatpush1.msra.mxu0 0.0
    %2045 = vmatprep.subr.mxu0 0.0
    %2046 = vmatpush1.msra.mxu0 0.0
    %2047 = vmatprep.subr.mxu0 0.0
    %2048 = vmatpush1.msra.mxu0 0.0
    %2049 = vmatprep.subr.mxu0 0.0
    %2050 = vmatpush1.msra.mxu0 0.0
    %2051 = vmatprep.subr.mxu0 0.0
    %2052 = vmatpush1.msra.mxu0 0.0
    %2053 = vmatprep.subr.mxu0 0.0
    %2054 = vmatpush1.msra.mxu0 0.0
    %2055 = vmatprep.subr.mxu0 0.0
    %2056 = vmatpush1.msra.mxu0 0.0
    %2057 = vmatprep.subr.mxu0 0.0
    %2058 = vmatpush1.msra.mxu0 0.0
    %2059 = vmatprep.subr.mxu0 0.0
    %2060 = vmatpush1.msra.mxu0 0.0
    %2061 = vmatprep.subr.mxu0 0.0
    %2062 = vmatpush1.msra.mxu0 0.0
    %2063 = vmatprep.subr.mxu0 0.0
    %2064 = vmatpush1.msra.mxu0 0.0
    %2065 = vmatprep.subr.mxu0 0.0
    %2066 = vmatpush1.msra.mxu0 0.0
    %2067 = vmatprep.subr.mxu0 0.0
    %2068 = vmatpush1.msra.mxu0 0.0
    %2069 = vmatprep.subr.mxu0 0.0
    %2070 = vmatpush1.msra.mxu0 0.0
    %2071 = vmatprep.subr.mxu0 0.0
    %2072 = vmatpush1.msra.mxu0 %v201
    %2073 = vmatprep.subr.mxu0 0.0
    %2074 = vmatpush2.msra.mxu0 0.0
    %2075 = vmatprep.subr.mxu0 0.0
    %2076 = vmatpush2.msra.mxu0 0.0
    %2077 = vmatprep.subr.mxu0 0.0
    %2078 = vmatpush2.msra.mxu0 0.0
    %2079 = vmatprep.subr.mxu0 0.0
    %2080 = vmatpush2.msra.mxu0 0.0
    %2081 = vmatprep.subr.mxu0 0.0
    %2082 = vmatpush2.msra.mxu0 0.0
    %2083 = vmatprep.subr.mxu0 0.0
    %2084 = vmatpush2.msra.mxu0 0.0
    %2085 = vmatprep.subr.mxu0 0.0
    %2086 = vmatpush2.msra.mxu0 0.0
    %2087 = vmatprep.subr.mxu0 0.0
    %2088 = vmatpush2.msra.mxu0 0.0
    %2089 = vmatprep.subr.mxu0 0.0
    %2090 = vmatpush2.msra.mxu0 0.0
    %2091 = vmatprep.subr.mxu0 0.0
    %2092 = vmatpush2.msra.mxu0 0.0
    %2093 = vmatprep.subr.mxu0 0.0
    %2094 = vmatpush2.msra.mxu0 0.0
    %2095 = vmatprep.subr.mxu0 0.0
    %2096 = vmatpush2.msra.mxu0 0.0
    %2097 = vmatprep.subr.mxu0 0.0
    %2098 = vmatpush2.msra.mxu0 0.0
    %2099 = vmatprep.subr.mxu0 0.0
    %2100 = vmatpush2.msra.mxu0 0.0
    %2101 = vmatprep.subr.mxu0 0.0
    %2102 = vmatpush2.msra.mxu0 0.0
    %2103 = vmatprep.subr.mxu0 0.0
    %2104 = vmatpush2.msra.mxu0 0.0
    %2105 = vmatprep.mubr.f32.mxu0 0.0
    %2106 = vmatmul.mubr.f32.gmra.mxu0 %v2039
    %v2107 = vpop.f32.mrf.mxu0
    %v2108 = vadd.f32 0.0, %v2107
    %v2109 = vpop.f32.mrf.mxu0
    %2110 = vdwg.mxu0
    %v2111 = vadd.f32 %v2037, %v2108
    %v2112 = vlaneseq
    %v2113 = vshrl.u32 %v2112, 7
    %v2114 = vsub.s32 4, %v2113
    %v2115 = vrot.slane %v68, %v2114
    %v2116 = vadd.f32 %v1156, %v2115
    %v2117 = vadd.f32 %v2111, %v2115
    %v2118 = vadd.f32 %v66, %v2116
    %v2119 = vadd.f32 %v67, %v2117
    %v2120 = vsel %vm69, %v2118, 0.0
    %2121 = vadd.xlane.f32.xlu0 %v2120
    %v2122 = vpop.xlane.xlu0 %2121
    %v2123 = vsel %vm69, %v2119, 0.0
    %2124 = vadd.xlane.f32.xlu0 %v2123
    %v2125 = vpop.xlane.xlu0 %2124
    %v2126 = vmul.f32 %v2122, %v76
    %v2127 = vmul.f32 %v2125, %v76
    %v2128 = vsub.f32 %v2118, %v2126
    %v2129 = vsub.f32 %v2119, %v2127
    %v2130 = vmul.f32 %v2128, %v2128
    %v2131 = vmul.f32 %v2129, %v2129
    %v2132 = vsel %vm69, %v2130, 0.0
    %2133 = vadd.xlane.f32.xlu0 %v2132
    %v2134 = vpop.xlane.xlu0 %2133
    %v2135 = vsel %vm69, %v2131, 0.0
    %2136 = vadd.xlane.f32.xlu0 %v2135
    %v2137 = vpop.xlane.xlu0 %2136
    %v2138 = vmul.f32 %v2134, %v76
    %v2139 = vmul.f32 %v2137, %v76
    %v2140 = vadd.f32 %v2138, 1e-05
    %v2141 = vadd.f32 %v2139, 1e-05
    %v2142 = vrsqrt.pop %v2140
    %v2143 = vrsqrt.pop %v2141
    %v2144 = vmul.f32 %v2128, %v2142
    %v2145 = vmul.f32 %v2129, %v2143
    %v2146 = vlaneseq
    %v2147 = vshrl.u32 %v2146, 7
    %v2148 = vsub.s32 2, %v2147
    %v2149 = vrot.slane %v68, %v2148
    %v2150 = vmul.f32 %v2144, %v2149
    %v2151 = vmul.f32 %v2145, %v2149
    %v2152 = vlaneseq
    %v2153 = vshrl.u32 %v2152, 7
    %v2154 = vsub.s32 3, %v2153
    %v2155 = vrot.slane %v68, %v2154
    %v2156 = vadd.f32 %v2150, %v2155
    %v2157 = vadd.f32 %v2151, %v2155
    %v2158 = vld [vmem:[%s5] sm:$0xff]
    %v2159 = vld [vmem:[%s5 + $0x8] sm:$0xff]
    %v2160 = vld [vmem:[%s5 + $0x10] sm:$0xff]
    %v2161 = vld [vmem:[%s5 + $0x18] sm:$0xff]
    %v2162 = vlaneseq
    %v2163 = vshrl.u32 %v2162, 7
    %v2164 = vsub.s32 7, %v2163
    %v2165 = vrot.slane %v68, %v2164
    %v2167 = vsel %vm69, %v2156, 0
    %v2170 = vsel %vm69, %v2157, 0
    %2172 = vmatprep.subr.mxu0 0.0
    %2173 = vmatpush1.msra.mxu0 0.0
    %2174 = vmatprep.subr.mxu0 0.0
    %2175 = vmatpush1.msra.mxu0 0.0
    %2176 = vmatprep.subr.mxu0 0.0
    %2177 = vmatpush1.msra.mxu0 0.0
    %2178 = vmatprep.subr.mxu0 0.0
    %2179 = vmatpush1.msra.mxu0 0.0
    %2180 = vmatprep.subr.mxu0 0.0
    %2181 = vmatpush1.msra.mxu0 0.0
    %2182 = vmatprep.subr.mxu0 0.0
    %2183 = vmatpush1.msra.mxu0 0.0
    %2184 = vmatprep.subr.mxu0 0.0
    %2185 = vmatpush1.msra.mxu0 0.0
    %2186 = vmatprep.subr.mxu0 0.0
    %2187 = vmatpush1.msra.mxu0 0.0
    %2188 = vmatprep.subr.mxu0 0.0
    %2189 = vmatpush1.msra.mxu0 0.0
    %2190 = vmatprep.subr.mxu0 0.0
    %2191 = vmatpush1.msra.mxu0 0.0
    %2192 = vmatprep.subr.mxu0 0.0
    %2193 = vmatpush1.msra.mxu0 0.0
    %2194 = vmatprep.subr.mxu0 0.0
    %2195 = vmatpush1.msra.mxu0 0.0
    %2196 = vmatprep.subr.mxu0 0.0
    %2197 = vmatpush1.msra.mxu0 %v2161
    %2198 = vmatprep.subr.mxu0 0.0
    %2199 = vmatpush1.msra.mxu0 %v2160
    %2200 = vmatprep.subr.mxu0 0.0
    %2201 = vmatpush1.msra.mxu0 %v2159
    %2202 = vmatprep.subr.mxu0 0.0
    %2203 = vmatpush1.msra.mxu0 %v2158
    %2204 = vmatprep.subr.mxu0 0.0
    %2205 = vmatpush2.msra.mxu0 0.0
    %2206 = vmatprep.subr.mxu0 0.0
    %2207 = vmatpush2.msra.mxu0 0.0
    %2208 = vmatprep.subr.mxu0 0.0
    %2209 = vmatpush2.msra.mxu0 0.0
    %2210 = vmatprep.subr.mxu0 0.0
    %2211 = vmatpush2.msra.mxu0 0.0
    %2212 = vmatprep.subr.mxu0 0.0
    %2213 = vmatpush2.msra.mxu0 0.0
    %2214 = vmatprep.subr.mxu0 0.0
    %2215 = vmatpush2.msra.mxu0 0.0
    %2216 = vmatprep.subr.mxu0 0.0
    %2217 = vmatpush2.msra.mxu0 0.0
    %2218 = vmatprep.subr.mxu0 0.0
    %2219 = vmatpush2.msra.mxu0 0.0
    %2220 = vmatprep.subr.mxu0 0.0
    %2221 = vmatpush2.msra.mxu0 0.0
    %2222 = vmatprep.subr.mxu0 0.0
    %2223 = vmatpush2.msra.mxu0 0.0
    %2224 = vmatprep.subr.mxu0 0.0
    %2225 = vmatpush2.msra.mxu0 0.0
    %2226 = vmatprep.subr.mxu0 0.0
    %2227 = vmatpush2.msra.mxu0 0.0
    %2228 = vmatprep.subr.mxu0 0.0
    %2229 = vmatpush2.msra.mxu0 0.0
    %2230 = vmatprep.subr.mxu0 0.0
    %2231 = vmatpush2.msra.mxu0 0.0
    %2232 = vmatprep.subr.mxu0 0.0
    %2233 = vmatpush2.msra.mxu0 0.0
    %2234 = vmatprep.subr.mxu0 0.0
    %2235 = vmatpush2.msra.mxu0 0.0
    %2236 = vmatprep.mubr.f32.mxu0 0.0
    %2237 = vmatmul.mubr.f32.gmra.mxu0 %v2167
    %v2238 = vpop.f32.mrf.mxu0
    %v2239 = vadd.f32 %v2165, %v2238
    %v2240 = vpop.f32.mrf.mxu0
    %2241 = vmatprep.mubr.f32.mxu0 0.0
    %2242 = vmatmul.mubr.f32.gmra.mxu0 %v2170
    %v2243 = vpop.f32.mrf.mxu0
    %v2244 = vadd.f32 %v2165, %v2243
    %v2245 = vpop.f32.mrf.mxu0
    %2246 = vdwg.mxu0
    %v2247 = vmul.f32 %v2239, 0.5
    %v2248 = vmul.f32 %v2244, 0.5
    %v2249 = vmul.f32 %v2239, 0.044715
    %v2250 = vmul.f32 %v2244, 0.044715
    %v2251 = vmul.f32 %v2249, %v2239
    %v2252 = vmul.f32 %v2250, %v2244
    %v2253 = vmul.f32 %v2251, %v2239
    %v2254 = vmul.f32 %v2252, %v2244
    %v2255 = vadd.f32 %v2239, %v2253
    %v2256 = vadd.f32 %v2244, %v2254
    %v2257 = vmul.f32 %v2255, 0.7978846
    %v2258 = vmul.f32 %v2256, 0.7978846
    %v2259 = vtanh.pop %v2257
    %v2260 = vtanh.pop %v2258
    %v2261 = vadd.f32 %v2259, 1.0
    %v2262 = vadd.f32 %v2260, 1.0
    %v2263 = vmul.f32 %v2247, %v2261
    %v2264 = vmul.f32 %v2248, %v2262
    %v2265 = vld [vmem:[%s6] sm:$0xff]
    %v2266 = vld [vmem:[%s6 + $0x8] sm:$0xff]
    %v2267 = vld [vmem:[%s6 + $0x10] sm:$0xff]
    %v2268 = vld [vmem:[%s6 + $0x18] sm:$0xff]
    %v2269 = vld [vmem:[%s6 + $0x20] sm:$0xff]
    %v2270 = vld [vmem:[%s6 + $0x28] sm:$0xff]
    %v2271 = vld [vmem:[%s6 + $0x30] sm:$0xff]
    %v2272 = vld [vmem:[%s6 + $0x38] sm:$0xff]
    %v2273 = vlaneseq
    %v2274 = vshrl.u32 %v2273, 7
    %v2275 = vsub.s32 5, %v2274
    %v2276 = vrot.slane %v68, %v2275
    %vm2277 = vcmask 523264
    %v2279 = vsel %vm2277, %v2263, 0
    %v2282 = vsel %vm2277, %v2264, 0
    %2284 = vmatprep.subr.mxu0 0.0
    %2285 = vmatpush1.msra.mxu0 0.0
    %2286 = vmatprep.subr.mxu0 0.0
    %2287 = vmatpush1.msra.mxu0 0.0
    %2288 = vmatprep.subr.mxu0 0.0
    %2289 = vmatpush1.msra.mxu0 0.0
    %2290 = vmatprep.subr.mxu0 0.0
    %2291 = vmatpush1.msra.mxu0 0.0
    %2292 = vmatprep.subr.mxu0 0.0
    %2293 = vmatpush1.msra.mxu0 0.0
    %2294 = vmatprep.subr.mxu0 0.0
    %2295 = vmatpush1.msra.mxu0 0.0
    %2296 = vmatprep.subr.mxu0 0.0
    %2297 = vmatpush1.msra.mxu0 0.0
    %2298 = vmatprep.subr.mxu0 0.0
    %2299 = vmatpush1.msra.mxu0 0.0
    %2300 = vmatprep.subr.mxu0 0.0
    %2301 = vmatpush1.msra.mxu0 %v2272
    %2302 = vmatprep.subr.mxu0 0.0
    %2303 = vmatpush1.msra.mxu0 %v2271
    %2304 = vmatprep.subr.mxu0 0.0
    %2305 = vmatpush1.msra.mxu0 %v2270
    %2306 = vmatprep.subr.mxu0 0.0
    %2307 = vmatpush1.msra.mxu0 %v2269
    %2308 = vmatprep.subr.mxu0 0.0
    %2309 = vmatpush1.msra.mxu0 %v2268
    %2310 = vmatprep.subr.mxu0 0.0
    %2311 = vmatpush1.msra.mxu0 %v2267
    %2312 = vmatprep.subr.mxu0 0.0
    %2313 = vmatpush1.msra.mxu0 %v2266
    %2314 = vmatprep.subr.mxu0 0.0
    %2315 = vmatpush1.msra.mxu0 %v2265
    %2316 = vmatprep.subr.mxu0 0.0
    %2317 = vmatpush2.msra.mxu0 0.0
    %2318 = vmatprep.subr.mxu0 0.0
    %2319 = vmatpush2.msra.mxu0 0.0
    %2320 = vmatprep.subr.mxu0 0.0
    %2321 = vmatpush2.msra.mxu0 0.0
    %2322 = vmatprep.subr.mxu0 0.0
    %2323 = vmatpush2.msra.mxu0 0.0
    %2324 = vmatprep.subr.mxu0 0.0
    %2325 = vmatpush2.msra.mxu0 0.0
    %2326 = vmatprep.subr.mxu0 0.0
    %2327 = vmatpush2.msra.mxu0 0.0
    %2328 = vmatprep.subr.mxu0 0.0
    %2329 = vmatpush2.msra.mxu0 0.0
    %2330 = vmatprep.subr.mxu0 0.0
    %2331 = vmatpush2.msra.mxu0 0.0
    %2332 = vmatprep.subr.mxu0 0.0
    %2333 = vmatpush2.msra.mxu0 0.0
    %2334 = vmatprep.subr.mxu0 0.0
    %2335 = vmatpush2.msra.mxu0 0.0
    %2336 = vmatprep.subr.mxu0 0.0
    %2337 = vmatpush2.msra.mxu0 0.0
    %2338 = vmatprep.subr.mxu0 0.0
    %2339 = vmatpush2.msra.mxu0 0.0
    %2340 = vmatprep.subr.mxu0 0.0
    %2341 = vmatpush2.msra.mxu0 0.0
    %2342 = vmatprep.subr.mxu0 0.0
    %2343 = vmatpush2.msra.mxu0 0.0
    %2344 = vmatprep.subr.mxu0 0.0
    %2345 = vmatpush2.msra.mxu0 0.0
    %2346 = vmatprep.subr.mxu0 0.0
    %2347 = vmatpush2.msra.mxu0 0.0
    %2348 = vmatprep.mubr.f32.mxu0 0.0
    %2349 = vmatmul.mubr.f32.gmra.mxu0 %v2279
    %v2350 = vpop.f32.mrf.mxu0
    %v2351 = vadd.f32 %v2276, %v2350
    %v2352 = vpop.f32.mrf.mxu0
    %2353 = vmatprep.mubr.f32.mxu0 0.0
    %2354 = vmatmul.mubr.f32.gmra.mxu0 %v2282
    %v2355 = vpop.f32.mrf.mxu0
    %v2356 = vadd.f32 %v2276, %v2355
    %v2357 = vpop.f32.mrf.mxu0
    %2358 = vdwg.mxu0
    %v2359 = vadd.f32 %v2118, %v2351
    %v2360 = vadd.f32 %v2119, %v2356
    %2361 = vst.msk [vmem:[#allocation8] sm:$0xff] %vm69, %v2359
    %2362 = vst.msk [vmem:[#allocation8 + $0x8] sm:$0xff] %vm69, %v2360
    // Predicated region
    $region42: #{tpu_custom_call.1} parent=1 // pred_check
      _
    $region43: #{tpu_custom_call.1} parent=1 // pred_check_branch
      %2364 = sbr.rel (0) target = $region45
    $region44: #{tpu_custom_call.1} parent=1 // pred_region
      %s2366 = ssub.s32 256, 256
      %2367 = vsyncadd [#allocation4], %s2366
      %s2368 = sshll.u32 [#allocation8], 4
      %s2369 = int_to_ptr.vmem [resolvable:$true] %s2368
      %2374 = dma.vmem_to_hbm [thread:$0]  %s2369, 256, %s7, [#allocation4], 128, 128, 8
    $region45: #{tpu_custom_call.1} parent=1 // pred_fallthru
      _
    // Predicated region
    $region46: #{tpu_custom_call.1} parent=1 // pred_check
      _
    $region47: #{tpu_custom_call.1} parent=1 // pred_check_branch
      %2376 = sbr.rel (0) target = $region49
    $region48: #{tpu_custom_call.1} parent=1 // pred_region
      %2377 = dma.done [#allocation4], 256
    $region49: #{tpu_custom_call.1} parent=1 // pred_fallthru
      _
    %2378 = vsyncpa [#allocation3], 1
    %2379 = vsyncpa [#allocation6], 1
    %2380 = vsyncpa [#allocation4], 1

</llo_original>
